<compile_context>
chip_gen: v6e
topology: v6e:2x2x1
jax: 0.10.0
libtpu: 0.0.40
codegen_flags: <defaults>
</compile_context>

<pallas_src>
import jax
import jax.numpy as jnp
from jax.experimental import pallas as pl
from jax.experimental.pallas import tpu as pltpu


def _classifier_kernel(at_ref, w1_ref, b1_ref, w2_ref, b2_ref, wc_ref, bc_ref,
                       out_ref):
    AT = at_ref[...]                       # (Gb, N, N) bf16, AT[g, dst, src]
    Gb, N, _ = at_ref.shape
    H = w2_ref.shape[0]
    f32 = jnp.float32
    bdot = (((2,), (1,)), ((0,), (0,)))    # standard batched matmul dims

    # ---- degrees via MXU matvecs (0/1 bf16 operands, exact f32 accum) -----
    ones_col = jnp.ones((Gb, N, 1), AT.dtype)
    ones_row = jnp.ones((Gb, 1, N), AT.dtype)
    in_deg = jax.lax.dot_general(AT, ones_col, bdot,
                                 preferred_element_type=f32)        # (Gb,N,1)
    out_deg_row = jax.lax.dot_general(ones_row, AT, bdot,
                                      preferred_element_type=f32)   # (Gb,1,N)

    # norm='both': dst scale kept as an f32 column; src scale folded into AT.
    norm_dst = jnp.where(in_deg > 0, jax.lax.rsqrt(in_deg), 0.0)    # (Gb,N,1)
    ns_row = jnp.where(out_deg_row > 0, jax.lax.rsqrt(out_deg_row), 0.0)
    ATn = AT * ns_row.astype(AT.dtype)                              # (Gb,N,N)

    # ---- GraphConv 1 (in_dim = 1 -> rank-1) + ReLU -------------------------
    # TODO(synk): for N > 256 keep the degree feature in f32 (bf16 loses
    # integer exactness above 256).
    x1 = in_deg.astype(AT.dtype)                                    # (Gb,N,1)
    agg1 = jax.lax.dot_general(ATn, x1, bdot,
                               preferred_element_type=f32)          # (Gb,N,1)
    h1 = jnp.maximum((agg1 * norm_dst) * w1_ref[...] + b1_ref[...], 0.0)

    # ---- GraphConv 2 + ReLU -------------------------------------------------
    t2 = jnp.dot(h1.reshape(Gb * N, H), w2_ref[...],
                 preferred_element_type=f32)                        # (Gb*N,H)
    t2 = t2.astype(AT.dtype).reshape(Gb, N, H)
    agg2 = jax.lax.dot_general(ATn, t2, bdot,
                               preferred_element_type=f32)          # (Gb,N,H)
    h2 = jnp.maximum(agg2 * norm_dst + b2_ref[...], 0.0)            # (Gb,N,H)

    # ---- mean_nodes folded into classify (all 2-D, lane dense) -------------
    h2f = h2.reshape(Gb * N, H)
    col = jax.lax.broadcasted_iota(jnp.int32, (Gb, Gb * N), 1)
    row = jax.lax.broadcasted_iota(jnp.int32, (Gb, Gb * N), 0)
    lo = row * N
    seg_mean = jnp.where((col >= lo) & (col < lo + N),
                         jnp.float32(1.0 / N), jnp.float32(0.0))    # (Gb,Gb*N)
    hg = jnp.dot(seg_mean, h2f, preferred_element_type=f32)         # (Gb, H)
    out_ref[...] = (jnp.dot(hg, wc_ref[...], preferred_element_type=f32)
                    + bc_ref[...])                                  # (Gb, C)


def classifier_forward(adj, w1, b1, w2, b2, wc, bc, *, graphs_per_block=8):
    """adj: (G, N, N) float dense adjacency, adj[g, src, dst] = 1.0 if edge.
    Returns logits of shape (G, n_classes)."""
    G, N, _ = adj.shape
    H = w1.shape[1]
    C = wc.shape[1]
    if N % 8 != 0:
        # TODO(synk): pad N (with a per-graph node-count mask for mean_nodes)
        # if graphs whose node count is not a multiple of 8 are needed.
        raise ValueError("node count N must be a multiple of 8")

    Gb = max(8, (graphs_per_block // 8) * 8)      # output block rows % 8 == 0
    G_pad = ((G + Gb - 1) // Gb) * Gb
    if G_pad != G:
        adj = jnp.pad(adj, ((0, G_pad - G), (0, 0), (0, 0)))

    # Transposed bf16 adjacency AT[g, dst, src]; one fused XLA transpose+cast
    # outside the kernel, 0/1 values are exact in bf16.
    adj_t = jnp.swapaxes(adj, 1, 2).astype(jnp.bfloat16)

    w_full = lambda g: (0, 0)
    flops = G_pad * (2 * N * N * (H + 4) + 2 * N * H * H + 8 * N * H + 2 * H * C)
    bytes_accessed = (G_pad * N * N * 2 + G_pad * C * 4
                      + 4 * (3 * H + H * H + H * C + C))

    out = pl.pallas_call(
        _classifier_kernel,
        out_shape=jax.ShapeDtypeStruct((G_pad, C), jnp.float32),
        grid_spec=pltpu.PrefetchScalarGridSpec(
            num_scalar_prefetch=0,
            grid=(G_pad // Gb,),
            in_specs=[
                pl.BlockSpec((Gb, N, N), lambda g: (g, 0, 0)),  # AT (bf16)
                pl.BlockSpec((1, H), w_full),                   # W1 (1, H)
                pl.BlockSpec((1, H), w_full),                   # b1 (1, H)
                pl.BlockSpec((H, H), w_full),                   # W2 (H, H)
                pl.BlockSpec((1, H), w_full),                   # b2 (1, H)
                pl.BlockSpec((H, C), w_full),                   # Wc (H, C)
                pl.BlockSpec((1, C), w_full),                   # bc (1, C)
            ],
            out_specs=pl.BlockSpec((Gb, C), lambda g: (g, 0)),
        ),
        compiler_params=pltpu.CompilerParams(
            dimension_semantics=("parallel",),   # shards graph axis on v7x
            vmem_limit_bytes=32 * 1024 * 1024,
        ),
        cost_estimate=pl.CostEstimate(
            flops=int(flops),
            transcendentals=int(2 * G_pad * N),
            bytes_accessed=int(bytes_accessed),
        ),
    )(adj_t, w1, b1, w2, b2, wc, bc)
    return out[:G]


def init_params(key, in_dim, hidden_dim, n_classes):
    k1, k2, k3 = jax.random.split(key, 3)

    def glorot(k, shape):
        fan_in, fan_out = shape
        lim = jnp.sqrt(6.0 / (fan_in + fan_out))
        return jax.random.uniform(k, shape, jnp.float32, -lim, lim)

    w1 = glorot(k1, (in_dim, hidden_dim))
    b1 = jnp.zeros((1, hidden_dim), jnp.float32)
    w2 = glorot(k2, (hidden_dim, hidden_dim))
    b2 = jnp.zeros((1, hidden_dim), jnp.float32)
    wc = glorot(k3, (hidden_dim, n_classes))   # Linear weight, stored transposed
    bc = jnp.zeros((1, n_classes), jnp.float32)
    return w1, b1, w2, b2, wc, bc


if __name__ == "__main__":
    key = jax.random.PRNGKey(0)
    G, N = 16, 16                       # 16 graphs, 16 nodes each
    in_dim, hidden, n_classes = 1, 32, 4

    kadj, kparam = jax.random.split(key)
    # Random directed adjacency, no self-loops.
    adj = (jax.random.uniform(kadj, (G, N, N)) < 0.3).astype(jnp.float32)
    adj = adj * (1.0 - jnp.eye(N, dtype=jnp.float32)[None])

    params = init_params(kparam, in_dim, hidden, n_classes)

    logits = classifier_forward(adj, *params)
    jax.block_until_ready(logits)

    assert logits.shape == (G, n_classes)
    assert bool(jnp.all(jnp.isfinite(logits)))
    print("KERNEL_OK")
</pallas_src>

<mosaic_0001>
module attributes {stable_mosaic.version = 11 : i64} {
  func.func @_classifier_kernel(%arg0: i32, %arg1: memref<8x16x16xbf16, #tpu.memory_space<vmem>>, %arg2: memref<1x32xf32, #tpu.memory_space<vmem>>, %arg3: memref<1x32xf32, #tpu.memory_space<vmem>>, %arg4: memref<32x32xf32, #tpu.memory_space<vmem>>, %arg5: memref<1x32xf32, #tpu.memory_space<vmem>>, %arg6: memref<32x4xf32, #tpu.memory_space<vmem>>, %arg7: memref<1x4xf32, #tpu.memory_space<vmem>>, %arg8: memref<8x4xf32, #tpu.memory_space<vmem>>) attributes {dimension_semantics = [#tpu.dimension_semantics<parallel>], iteration_bounds = array<i64: 2>, scalar_prefetch = 0 : i64, scratch_operands = 0 : i64, tpu.core_type = #tpu.core_type<tc>, window_params = [{transform_indices = @transform_0, window_bounds = array<i64: 8, 16, 16>}, {pipeline_mode = #tpu.pipeline_mode<synchronous>, transform_indices = @transform_1, window_bounds = array<i64: 1, 32>}, {pipeline_mode = #tpu.pipeline_mode<synchronous>, transform_indices = @transform_2, window_bounds = array<i64: 1, 32>}, {pipeline_mode = #tpu.pipeline_mode<synchronous>, transform_indices = @transform_3, window_bounds = array<i64: 32, 32>}, {pipeline_mode = #tpu.pipeline_mode<synchronous>, transform_indices = @transform_4, window_bounds = array<i64: 1, 32>}, {pipeline_mode = #tpu.pipeline_mode<synchronous>, transform_indices = @transform_5, window_bounds = array<i64: 32, 4>}, {pipeline_mode = #tpu.pipeline_mode<synchronous>, transform_indices = @transform_6, window_bounds = array<i64: 1, 4>}, {transform_indices = @transform_7, window_bounds = array<i64: 8, 4>}]} {
    %c0 = arith.constant 0 : index
    %c0_0 = arith.constant 0 : index
    %c0_1 = arith.constant 0 : index
    %0 = vector.load %arg1[%c0, %c0_0, %c0_1] : memref<8x16x16xbf16, #tpu.memory_space<vmem>>, vector<8x16x16xbf16>
    %cst = arith.constant 1.000000e+00 : bf16
    %1 = vector.broadcast %cst : bf16 to vector<8x16x1xbf16>
    %cst_2 = arith.constant 1.000000e+00 : bf16
    %2 = vector.broadcast %cst_2 : bf16 to vector<8x1x16xbf16>
    %cst_3 = arith.constant dense<0.000000e+00> : vector<8x16x1xf32>
    %3 = tpu.matmul %0, %1, %cst_3 {dimension_numbers = #tpu.dot_dimension_numbers<[2], [1], [1], [2], [0, 0, 0, 1, 1, 2], [0], [0]>} : vector<8x16x16xbf16>, vector<8x16x1xbf16>, vector<8x16x1xf32> -> vector<8x16x1xf32>
    %cst_4 = arith.constant dense<0.000000e+00> : vector<8x1x16xf32>
    %4 = tpu.matmul %2, %0, %cst_4 {dimension_numbers = #tpu.dot_dimension_numbers<[2], [1], [1], [2], [0, 0, 0, 1, 1, 2], [0], [0]>} : vector<8x1x16xbf16>, vector<8x16x16xbf16>, vector<8x1x16xf32> -> vector<8x1x16xf32>
    %cst_5 = arith.constant 0.000000e+00 : f32
    %5 = vector.broadcast %cst_5 : f32 to vector<8x16x1xf32>
    %6 = arith.cmpf ogt, %3, %5 : vector<8x16x1xf32>
    %7 = math.rsqrt %3 : vector<8x16x1xf32>
    %cst_6 = arith.constant 0.000000e+00 : f32
    %8 = vector.broadcast %cst_6 : f32 to vector<8x16x1xf32>
    %9 = arith.select %6, %7, %8 : vector<8x16x1xi1>, vector<8x16x1xf32>
    %cst_7 = arith.constant 0.000000e+00 : f32
    %10 = vector.broadcast %cst_7 : f32 to vector<8x1x16xf32>
    %11 = arith.cmpf ogt, %4, %10 : vector<8x1x16xf32>
    %12 = math.rsqrt %4 : vector<8x1x16xf32>
    %cst_8 = arith.constant 0.000000e+00 : f32
    %13 = vector.broadcast %cst_8 : f32 to vector<8x1x16xf32>
    %14 = arith.select %11, %12, %13 : vector<8x1x16xi1>, vector<8x1x16xf32>
    %15 = arith.truncf %14 : vector<8x1x16xf32> to vector<8x1x16xbf16>
    %16 = vector.broadcast %15 : vector<8x1x16xbf16> to vector<8x16x16xbf16>
    %17 = arith.mulf %0, %16 : vector<8x16x16xbf16>
    %18 = arith.truncf %3 : vector<8x16x1xf32> to vector<8x16x1xbf16>
    %cst_9 = arith.constant dense<0.000000e+00> : vector<8x16x1xf32>
    %19 = tpu.matmul %17, %18, %cst_9 {dimension_numbers = #tpu.dot_dimension_numbers<[2], [1], [1], [2], [0, 0, 0, 1, 1, 2], [0], [0]>} : vector<8x16x16xbf16>, vector<8x16x1xbf16>, vector<8x16x1xf32> -> vector<8x16x1xf32>
    %20 = arith.mulf %19, %9 : vector<8x16x1xf32>
    %c0_10 = arith.constant 0 : index
    %c0_11 = arith.constant 0 : index
    %21 = vector.load %arg2[%c0_10, %c0_11] : memref<1x32xf32, #tpu.memory_space<vmem>>, vector<1x32xf32>
    %22 = vector.shape_cast %21 : vector<1x32xf32> to vector<1x1x32xf32>
    %23 = vector.broadcast %20 : vector<8x16x1xf32> to vector<8x16x32xf32>
    %24 = vector.broadcast %22 : vector<1x1x32xf32> to vector<8x16x32xf32>
    %25 = arith.mulf %23, %24 : vector<8x16x32xf32>
    %c0_12 = arith.constant 0 : index
    %c0_13 = arith.constant 0 : index
    %26 = vector.load %arg3[%c0_12, %c0_13] : memref<1x32xf32, #tpu.memory_space<vmem>>, vector<1x32xf32>
    %27 = vector.shape_cast %26 : vector<1x32xf32> to vector<1x1x32xf32>
    %28 = vector.broadcast %27 : vector<1x1x32xf32> to vector<8x16x32xf32>
    %29 = arith.addf %25, %28 : vector<8x16x32xf32>
    %cst_14 = arith.constant 0.000000e+00 : f32
    %30 = vector.broadcast %cst_14 : f32 to vector<8x16x32xf32>
    %31 = arith.maximumf %29, %30 : vector<8x16x32xf32>
    %32 = vector.shape_cast %31 : vector<8x16x32xf32> to vector<128x32xf32>
    %c0_15 = arith.constant 0 : index
    %c0_16 = arith.constant 0 : index
    %33 = vector.load %arg4[%c0_15, %c0_16] : memref<32x32xf32, #tpu.memory_space<vmem>>, vector<32x32xf32>
    %cst_17 = arith.constant dense<0.000000e+00> : vector<128x32xf32>
    %34 = tpu.matmul %32, %33, %cst_17 {dimension_numbers = #tpu.dot_dimension_numbers<[1], [0], [0], [1], [0, 0, 1, 1], [], []>} : vector<128x32xf32>, vector<32x32xf32>, vector<128x32xf32> -> vector<128x32xf32>
    %35 = arith.truncf %34 : vector<128x32xf32> to vector<128x32xbf16>
    %36 = vector.shape_cast %35 : vector<128x32xbf16> to vector<8x16x32xbf16>
    %cst_18 = arith.constant dense<0.000000e+00> : vector<8x16x32xf32>
    %37 = tpu.matmul %17, %36, %cst_18 {dimension_numbers = #tpu.dot_dimension_numbers<[2], [1], [1], [2], [0, 0, 0, 1, 1, 2], [0], [0]>} : vector<8x16x16xbf16>, vector<8x16x32xbf16>, vector<8x16x32xf32> -> vector<8x16x32xf32>
    %38 = vector.broadcast %9 : vector<8x16x1xf32> to vector<8x16x32xf32>
    %39 = arith.mulf %37, %38 : vector<8x16x32xf32>
    %c0_19 = arith.constant 0 : index
    %c0_20 = arith.constant 0 : index
    %40 = vector.load %arg5[%c0_19, %c0_20] : memref<1x32xf32, #tpu.memory_space<vmem>>, vector<1x32xf32>
    %41 = vector.shape_cast %40 : vector<1x32xf32> to vector<1x1x32xf32>
    %42 = vector.broadcast %41 : vector<1x1x32xf32> to vector<8x16x32xf32>
    %43 = arith.addf %39, %42 : vector<8x16x32xf32>
    %cst_21 = arith.constant 0.000000e+00 : f32
    %44 = vector.broadcast %cst_21 : f32 to vector<8x16x32xf32>
    %45 = arith.maximumf %43, %44 : vector<8x16x32xf32>
    %46 = vector.shape_cast %45 : vector<8x16x32xf32> to vector<128x32xf32>
    %47 = tpu.iota {dimensions = array<i32: 1>} : vector<8x128xi32>
    %48 = tpu.iota {dimensions = array<i32: 0>} : vector<8x128xi32>
    %c16_i32 = arith.constant 16 : i32
    %49 = vector.broadcast %c16_i32 : i32 to vector<8x128xi32>
    %50 = arith.muli %48, %49 : vector<8x128xi32>
    %51 = arith.cmpi sge, %47, %50 : vector<8x128xi32>
    %c16_i32_22 = arith.constant 16 : i32
    %52 = vector.broadcast %c16_i32_22 : i32 to vector<8x128xi32>
    %53 = arith.addi %50, %52 : vector<8x128xi32>
    %54 = arith.cmpi slt, %47, %53 : vector<8x128xi32>
    %55 = arith.andi %51, %54 : vector<8x128xi1>
    %cst_23 = arith.constant 6.250000e-02 : f32
    %cst_24 = arith.constant 0.000000e+00 : f32
    %56 = vector.broadcast %cst_23 : f32 to vector<8x128xf32>
    %57 = vector.broadcast %cst_24 : f32 to vector<8x128xf32>
    %58 = arith.select %55, %56, %57 : vector<8x128xi1>, vector<8x128xf32>
    %cst_25 = arith.constant dense<0.000000e+00> : vector<8x32xf32>
    %59 = tpu.matmul %58, %46, %cst_25 {dimension_numbers = #tpu.dot_dimension_numbers<[1], [0], [0], [1], [0, 0, 1, 1], [], []>} : vector<8x128xf32>, vector<128x32xf32>, vector<8x32xf32> -> vector<8x32xf32>
    %c0_26 = arith.constant 0 : index
    %c0_27 = arith.constant 0 : index
    %60 = vector.load %arg6[%c0_26, %c0_27] : memref<32x4xf32, #tpu.memory_space<vmem>>, vector<32x4xf32>
    %cst_28 = arith.constant dense<0.000000e+00> : vector<8x4xf32>
    %61 = tpu.matmul %59, %60, %cst_28 {dimension_numbers = #tpu.dot_dimension_numbers<[1], [0], [0], [1], [0, 0, 1, 1], [], []>} : vector<8x32xf32>, vector<32x4xf32>, vector<8x4xf32> -> vector<8x4xf32>
    %c0_29 = arith.constant 0 : index
    %c0_30 = arith.constant 0 : index
    %62 = vector.load %arg7[%c0_29, %c0_30] : memref<1x4xf32, #tpu.memory_space<vmem>>, vector<1x4xf32>
    %63 = vector.broadcast %62 : vector<1x4xf32> to vector<8x4xf32>
    %64 = arith.addf %61, %63 : vector<8x4xf32>
    %c0_31 = arith.constant 0 : index
    %c0_32 = arith.constant 0 : index
    %65 = vector.load %arg8[%c0_31, %c0_32] : memref<8x4xf32, #tpu.memory_space<vmem>>, vector<8x4xf32>
    tpu.vector_store %arg8[%c0_31, %c0_32], %64 {strides = array<i32>} : memref<8x4xf32, #tpu.memory_space<vmem>>, vector<8x4xf32>,
    return
  }
  func.func @transform_0(%arg0: i32) -> (i32, i32, i32) {
    %c0_i32 = arith.constant 0 : i32
    %c0_i32_0 = arith.constant 0 : i32
    %c0_i32_1 = arith.constant 0 : i32
    return %arg0, %c0_i32, %c0_i32_0 : i32, i32, i32
  }
  func.func @transform_1(%arg0: i32) -> (i32, i32) {
    %c0_i32 = arith.constant 0 : i32
    %c0_i32_0 = arith.constant 0 : i32
    %c0_i32_1 = arith.constant 0 : i32
    return %c0_i32, %c0_i32_0 : i32, i32
  }
  func.func @transform_2(%arg0: i32) -> (i32, i32) {
    %c0_i32 = arith.constant 0 : i32
    %c0_i32_0 = arith.constant 0 : i32
    %c0_i32_1 = arith.constant 0 : i32
    return %c0_i32, %c0_i32_0 : i32, i32
  }
  func.func @transform_3(%arg0: i32) -> (i32, i32) {
    %c0_i32 = arith.constant 0 : i32
    %c0_i32_0 = arith.constant 0 : i32
    %c0_i32_1 = arith.constant 0 : i32
    return %c0_i32, %c0_i32_0 : i32, i32
  }
  func.func @transform_4(%arg0: i32) -> (i32, i32) {
    %c0_i32 = arith.constant 0 : i32
    %c0_i32_0 = arith.constant 0 : i32
    %c0_i32_1 = arith.constant 0 : i32
    return %c0_i32, %c0_i32_0 : i32, i32
  }
  func.func @transform_5(%arg0: i32) -> (i32, i32) {
    %c0_i32 = arith.constant 0 : i32
    %c0_i32_0 = arith.constant 0 : i32
    %c0_i32_1 = arith.constant 0 : i32
    return %c0_i32, %c0_i32_0 : i32, i32
  }
  func.func @transform_6(%arg0: i32) -> (i32, i32) {
    %c0_i32 = arith.constant 0 : i32
    %c0_i32_0 = arith.constant 0 : i32
    %c0_i32_1 = arith.constant 0 : i32
    return %c0_i32, %c0_i32_0 : i32, i32
  }
  func.func @transform_7(%arg0: i32) -> (i32, i32) {
    %c0_i32 = arith.constant 0 : i32
    %c0_i32_0 = arith.constant 0 : i32
    return %arg0, %c0_i32 : i32, i32
  }
}

</mosaic_0001>

<llo_original>
// kernel: tpu_custom_call.1
$region0: #{tpu_custom_call.1}
  #allocation0 [shape = 'u32[]', space=smem, size = 0x4, offset = 0x4, fixed_abs, tag = 'smem constant byte address 0x4 - core index']
  #allocation1 [shape = 'u32[144,128]{1,0:T(1,128)}', space=vmem, size = 0x12000, scoped, tag = 'internal scratch']
  %s0 = inlined_call_operand.hbm [shape: bf16[16,16,16], index: 0, kind: input, shape index: {}]
  %s1 = inlined_call_operand.vmem [shape: f32[1,32], index: 1, kind: input, shape index: {}]
  %s2 = inlined_call_operand.vmem [shape: f32[1,32], index: 2, kind: input, shape index: {}]
  %s3 = inlined_call_operand.vmem [shape: f32[32,32], index: 3, kind: input, shape index: {}]
  %s4 = inlined_call_operand.vmem [shape: f32[1,32], index: 4, kind: input, shape index: {}]
  %s5 = inlined_call_operand.vmem [shape: f32[32,4], index: 5, kind: input, shape index: {}]
  %s6 = inlined_call_operand.vmem [shape: f32[1,4], index: 6, kind: input, shape index: {}]
  %s7 = inlined_call_operand.vmem [shape: f32[16,4], index: 7, kind: output, shape index: {}]
  %s8 = sld [smem:[#allocation0]]
  $region65: #{tpu_custom_call.1} parent=0
    _
  %s10 = ssub.s32 1, %s8
  %s11 = scalar_select 0, %s10, %s8
  $region1: #{tpu_custom_call.1} parent=0
    #allocation2 [shape = 'u8[65536]{0}', space=vmem, size = 0x10000, scoped, tag = 'input window, operand 0']
    #allocation3 [shape = 's32[2]{0}', space=sflag, size = 0x8, scoped, tag = 'scoped memory for tpu_custom_call.1']
    %12 = vsyncpa [#allocation3], 0
    %s13 = scalar_lea.sflag [#allocation3], 1
    %14 = vsyncpa %s13, 0
    loop: start=0, step=1, limit=4
    $region2: #{tpu_custom_call.1} parent=1 // loop_pre_header
      _
    $region3: #{tpu_custom_call.1} parent=1 // loop_header
      %s16 = sphi 0, %s20
      %p17 = scmp.ge.s32.totalorder %s16, 4
      %s26 = sphi 0, %s28
      %s29 = sphi 0, %s26
      %s30 = sphi 0, %s29
      %s46 = sphi 0, %s30
      %s50 = sphi 0, %s50
      %s52 = sphi 0, %s50
      %s53 = sphi 0, %s52
      %s67 = sphi 0, %s53
      %s71 = sphi 0, %s71
      %s73 = sphi 0, %s71
      %s74 = sphi 0, %s73
      %s88 = sphi 0, %s74
      %s92 = sphi 0, %s92
      %s94 = sphi 0, %s92
      %s95 = sphi 0, %s94
      %s109 = sphi 0, %s95
      %s113 = sphi 0, %s113
      %s115 = sphi 0, %s113
      %s116 = sphi 0, %s115
      %s130 = sphi 0, %s116
      %s134 = sphi 0, %s134
      %s136 = sphi 0, %s134
      %s137 = sphi 0, %s136
      %s151 = sphi 0, %s137
      %s155 = sphi 0, %s155
      %s157 = sphi 0, %s155
      %s158 = sphi 0, %s157
      %s172 = sphi 0, %s158
      %s178 = sphi 0, %s180
      %s181 = sphi 0, %s178
      %s182 = sphi 0, %s181
      %s198 = sphi 0, %s182
    $region4: #{tpu_custom_call.1} parent=1 // loop_header_branch
      %19 = sbr.rel (%p17) target = $region8
    $region5: #{tpu_custom_call.1} parent=1 // loop_body
      %s21 = ssub.s32 %s16, 1
      %s22 = ssub.s32 %s16, 2
      %s23 = sadd.s32 %s16, 1
      %s24 = ssub.s32 %s16, %s23
      %p25 = scmp.eq.s32.totalorder %s24, 0
      %s27 = sadd.s32 %s26, 1
      %s28 = scalar_select %p25, %s26, %s27
      %p31 = pneg %p25
      %p32 = scmp.eq.s32.totalorder %s16, 1
      %p33 = por %p31, %p32
      %p34 = scmp.ne.s32.totalorder %s26, %s29
      %p35 = scmp.eq.s32.totalorder %s16, 0
      %p36 = por %p34, %p35
      %p37 = scmp.ne.s32.totalorder %s26, %s29
      %p38 = scmp.eq.s32.totalorder %s21, 1
      %p39 = por %p37, %p38
      %p40 = scmp.ne.s32.totalorder %s29, %s30
      %p41 = scmp.eq.s32.totalorder %s21, 0
      %p42 = por %p40, %p41
      %p43 = scmp.ne.s32.totalorder %s29, %s30
      %p44 = scmp.eq.s32.totalorder %s22, 1
      %p45 = por %p43, %p44
      %p47 = scmp.ne.s32.totalorder %s30, %s46
      %p48 = scmp.eq.s32.totalorder %s22, 0
      %p49 = por %p47, %p48
      %s51 = sadd.s32 %s50, 1
      %p54 = scmp.eq.s32.totalorder %s16, 1
      %p55 = scmp.ne.s32.totalorder %s50, %s52
      %p56 = scmp.eq.s32.totalorder %s16, 0
      %p57 = por %p55, %p56
      %p58 = scmp.ne.s32.totalorder %s50, %s52
      %p59 = scmp.eq.s32.totalorder %s21, 1
      %p60 = por %p58, %p59
      %p61 = scmp.ne.s32.totalorder %s52, %s53
      %p62 = scmp.eq.s32.totalorder %s21, 0
      %p63 = por %p61, %p62
      %p64 = scmp.ne.s32.totalorder %s52, %s53
      %p65 = scmp.eq.s32.totalorder %s22, 1
      %p66 = por %p64, %p65
      %p68 = scmp.ne.s32.totalorder %s53, %s67
      %p69 = scmp.eq.s32.totalorder %s22, 0
      %p70 = por %p68, %p69
      %s72 = sadd.s32 %s71, 1
      %p75 = scmp.eq.s32.totalorder %s16, 1
      %p76 = scmp.ne.s32.totalorder %s71, %s73
      %p77 = scmp.eq.s32.totalorder %s16, 0
      %p78 = por %p76, %p77
      %p79 = scmp.ne.s32.totalorder %s71, %s73
      %p80 = scmp.eq.s32.totalorder %s21, 1
      %p81 = por %p79, %p80
      %p82 = scmp.ne.s32.totalorder %s73, %s74
      %p83 = scmp.eq.s32.totalorder %s21, 0
      %p84 = por %p82, %p83
      %p85 = scmp.ne.s32.totalorder %s73, %s74
      %p86 = scmp.eq.s32.totalorder %s22, 1
      %p87 = por %p85, %p86
      %p89 = scmp.ne.s32.totalorder %s74, %s88
      %p90 = scmp.eq.s32.totalorder %s22, 0
      %p91 = por %p89, %p90
      %s93 = sadd.s32 %s92, 1
      %p96 = scmp.eq.s32.totalorder %s16, 1
      %p97 = scmp.ne.s32.totalorder %s92, %s94
      %p98 = scmp.eq.s32.totalorder %s16, 0
      %p99 = por %p97, %p98
      %p100 = scmp.ne.s32.totalorder %s92, %s94
      %p101 = scmp.eq.s32.totalorder %s21, 1
      %p102 = por %p100, %p101
      %p103 = scmp.ne.s32.totalorder %s94, %s95
      %p104 = scmp.eq.s32.totalorder %s21, 0
      %p105 = por %p103, %p104
      %p106 = scmp.ne.s32.totalorder %s94, %s95
      %p107 = scmp.eq.s32.totalorder %s22, 1
      %p108 = por %p106, %p107
      %p110 = scmp.ne.s32.totalorder %s95, %s109
      %p111 = scmp.eq.s32.totalorder %s22, 0
      %p112 = por %p110, %p111
      %s114 = sadd.s32 %s113, 1
      %p117 = scmp.eq.s32.totalorder %s16, 1
      %p118 = scmp.ne.s32.totalorder %s113, %s115
      %p119 = scmp.eq.s32.totalorder %s16, 0
      %p120 = por %p118, %p119
      %p121 = scmp.ne.s32.totalorder %s113, %s115
      %p122 = scmp.eq.s32.totalorder %s21, 1
      %p123 = por %p121, %p122
      %p124 = scmp.ne.s32.totalorder %s115, %s116
      %p125 = scmp.eq.s32.totalorder %s21, 0
      %p126 = por %p124, %p125
      %p127 = scmp.ne.s32.totalorder %s115, %s116
      %p128 = scmp.eq.s32.totalorder %s22, 1
      %p129 = por %p127, %p128
      %p131 = scmp.ne.s32.totalorder %s116, %s130
      %p132 = scmp.eq.s32.totalorder %s22, 0
      %p133 = por %p131, %p132
      %s135 = sadd.s32 %s134, 1
      %p138 = scmp.eq.s32.totalorder %s16, 1
      %p139 = scmp.ne.s32.totalorder %s134, %s136
      %p140 = scmp.eq.s32.totalorder %s16, 0
      %p141 = por %p139, %p140
      %p142 = scmp.ne.s32.totalorder %s134, %s136
      %p143 = scmp.eq.s32.totalorder %s21, 1
      %p144 = por %p142, %p143
      %p145 = scmp.ne.s32.totalorder %s136, %s137
      %p146 = scmp.eq.s32.totalorder %s21, 0
      %p147 = por %p145, %p146
      %p148 = scmp.ne.s32.totalorder %s136, %s137
      %p149 = scmp.eq.s32.totalorder %s22, 1
      %p150 = por %p148, %p149
      %p152 = scmp.ne.s32.totalorder %s137, %s151
      %p153 = scmp.eq.s32.totalorder %s22, 0
      %p154 = por %p152, %p153
      %s156 = sadd.s32 %s155, 1
      %p159 = scmp.eq.s32.totalorder %s16, 1
      %p160 = scmp.ne.s32.totalorder %s155, %s157
      %p161 = scmp.eq.s32.totalorder %s16, 0
      %p162 = por %p160, %p161
      %p163 = scmp.ne.s32.totalorder %s155, %s157
      %p164 = scmp.eq.s32.totalorder %s21, 1
      %p165 = por %p163, %p164
      %p166 = scmp.ne.s32.totalorder %s157, %s158
      %p167 = scmp.eq.s32.totalorder %s21, 0
      %p168 = por %p166, %p167
      %p169 = scmp.ne.s32.totalorder %s157, %s158
      %p170 = scmp.eq.s32.totalorder %s22, 1
      %p171 = por %p169, %p170
      %p173 = scmp.ne.s32.totalorder %s158, %s172
      %p174 = scmp.eq.s32.totalorder %s22, 0
      %p175 = por %p173, %p174
      %s176 = ssub.s32 %s16, %s23
      %p177 = scmp.eq.s32.totalorder %s176, 0
      %s179 = sadd.s32 %s178, 1
      %s180 = scalar_select %p177, %s178, %s179
      %p183 = pneg %p177
      %p184 = scmp.eq.s32.totalorder %s16, 1
      %p185 = por %p183, %p184
      %p186 = scmp.ne.s32.totalorder %s178, %s181
      %p187 = scmp.eq.s32.totalorder %s16, 0
      %p188 = por %p186, %p187
      %p189 = scmp.ne.s32.totalorder %s178, %s181
      %p190 = scmp.eq.s32.totalorder %s21, 1
      %p191 = por %p189, %p190
      %p192 = scmp.ne.s32.totalorder %s181, %s182
      %p193 = scmp.eq.s32.totalorder %s21, 0
      %p194 = por %p192, %p193
      %p195 = scmp.ne.s32.totalorder %s181, %s182
      %p196 = scmp.eq.s32.totalorder %s22, 1
      %p197 = por %p195, %p196
      %p199 = scmp.ne.s32.totalorder %s182, %s198
      %p200 = scmp.eq.s32.totalorder %s22, 0
      %p201 = por %p199, %p200
      %p202 = scmp.le.s32.totalorder 1, %s16
      %p203 = scmp.lt.s32.totalorder %s16, 3
      %p204 = pnand %p202, %p203
      %p205 = pneg %p204
      // Predicated region
      $region9: #{tpu_custom_call.1} parent=5 // pred_check
        _
      $region10: #{tpu_custom_call.1} parent=5 // pred_check_branch
        %207 = sbr.rel (%p204) target = $region12
      $region11: #{tpu_custom_call.1} parent=5 // pred_region
        %s208 = ssub.s32 %s16, 1
        // Predicated region
        $region13: #{tpu_custom_call.1} parent=11 // pred_check
          %p209 = pneg %p63
        $region14: #{tpu_custom_call.1} parent=11 // pred_check_branch
          %211 = sbr.rel (%p209) target = $region16
        $region15: #{tpu_custom_call.1} parent=11 // pred_region
          _
        $region16: #{tpu_custom_call.1} parent=11 // pred_fallthru
          _
        // Predicated region
        $region17: #{tpu_custom_call.1} parent=11 // pred_check
          %p212 = pneg %p84
        $region18: #{tpu_custom_call.1} parent=11 // pred_check_branch
          %214 = sbr.rel (%p212) target = $region20
        $region19: #{tpu_custom_call.1} parent=11 // pred_region
          _
        $region20: #{tpu_custom_call.1} parent=11 // pred_fallthru
          _
        // Predicated region
        $region21: #{tpu_custom_call.1} parent=11 // pred_check
          %p215 = pneg %p105
        $region22: #{tpu_custom_call.1} parent=11 // pred_check_branch
          %217 = sbr.rel (%p215) target = $region24
        $region23: #{tpu_custom_call.1} parent=11 // pred_region
          _
        $region24: #{tpu_custom_call.1} parent=11 // pred_fallthru
          _
        // Predicated region
        $region25: #{tpu_custom_call.1} parent=11 // pred_check
          %p218 = pneg %p126
        $region26: #{tpu_custom_call.1} parent=11 // pred_check_branch
          %220 = sbr.rel (%p218) target = $region28
        $region27: #{tpu_custom_call.1} parent=11 // pred_region
          _
        $region28: #{tpu_custom_call.1} parent=11 // pred_fallthru
          _
        // Predicated region
        $region29: #{tpu_custom_call.1} parent=11 // pred_check
          %p221 = pneg %p147
        $region30: #{tpu_custom_call.1} parent=11 // pred_check_branch
          %223 = sbr.rel (%p221) target = $region32
        $region31: #{tpu_custom_call.1} parent=11 // pred_region
          _
        $region32: #{tpu_custom_call.1} parent=11 // pred_fallthru
          _
        // Predicated region
        $region33: #{tpu_custom_call.1} parent=11 // pred_check
          %p224 = pneg %p168
        $region34: #{tpu_custom_call.1} parent=11 // pred_check_branch
          %226 = sbr.rel (%p224) target = $region36
        $region35: #{tpu_custom_call.1} parent=11 // pred_region
          _
        $region36: #{tpu_custom_call.1} parent=11 // pred_fallthru
          _
      $region12: #{tpu_custom_call.1} parent=5 // pred_fallthru
        _
      %p227 = scmp.lt.s32.totalorder %s16, 2
      // Predicated region
      $region37: #{tpu_custom_call.1} parent=5 // pred_check
        %p228 = pneg %p227
      $region38: #{tpu_custom_call.1} parent=5 // pred_check_branch
        %230 = sbr.rel (%p228) target = $region40
      $region39: #{tpu_custom_call.1} parent=5 // pred_region
        // Predicated region
        $region41: #{tpu_custom_call.1} parent=39 // pred_check
          %p231 = pneg %p36
        $region42: #{tpu_custom_call.1} parent=39 // pred_check_branch
          %233 = sbr.rel (%p231) target = $region44
        $region43: #{tpu_custom_call.1} parent=39 // pred_region
          %s234 = sand.u32 %s26, 1
          %s235 = scalar_lea.sflag [#allocation3], %s234
          %s236 = sand.u32 %s26, 1
          %s237 = smul.addr %s236, 64
          %s238 = scalar_lea.vmem [#allocation2], %s237
          %s239 = smul.u32 8, %s16
          %s241 = ssub.s32 1024, 1024
          %242 = vsyncadd %s235, %s241
          %s243 = smul.addr %s239, 2
          %s244 = smul.addr %s243, 64
          %s245 = scalar_lea.hbm %s0, %s244
          %s246 = sshll.u32 %s238, 4
          %s247 = int_to_ptr.vmem [resolvable:$true] %s246
          %252 = dma.hbm_to_vmem [thread:$0]  %s245, 1024, %s247, %s235, 64, 64, 4
        $region44: #{tpu_custom_call.1} parent=39 // pred_fallthru
          _
      $region40: #{tpu_custom_call.1} parent=5 // pred_fallthru
        _
      %p253 = scmp.le.s32.totalorder 1, %s16
      %p254 = scmp.lt.s32.totalorder %s16, 3
      %p255 = pnand %p253, %p254
      %p256 = pneg %p255
      // Predicated region
      $region45: #{tpu_custom_call.1} parent=5 // pred_check
        _
      $region46: #{tpu_custom_call.1} parent=5 // pred_check_branch
        %258 = sbr.rel (%p255) target = $region48
      $region47: #{tpu_custom_call.1} parent=5 // pred_region
        %s259 = ssub.s32 %s16, 1
        %s260 = sand.u32 %s29, 1
        %s261 = scalar_lea.sflag [#allocation3], %s260
        %s262 = sand.u32 %s29, 1
        %s263 = smul.addr %s262, 64
        %s264 = scalar_lea.vmem [#allocation2], %s263
        // Predicated region
        $region49: #{tpu_custom_call.1} parent=47 // pred_check
          %p265 = pneg %p42
        $region50: #{tpu_custom_call.1} parent=47 // pred_check_branch
          %267 = sbr.rel (%p265) target = $region52
        $region51: #{tpu_custom_call.1} parent=47 // pred_region
          %268 = dma.done %s261, 1024
        $region52: #{tpu_custom_call.1} parent=47 // pred_fallthru
          _
        %s269 = sand.u32 %s29, 1
        %s270 = scalar_lea.sflag [#allocation3], %s269
        %s271 = sand.u32 %s29, 1
        %s272 = smul.addr %s271, 64
        %s273 = scalar_lea.vmem [#allocation2], %s272
        %p274 = pneg %p42
        %p275 = pneg %p39
        %p276 = pneg %p63
        %p277 = pneg %p60
        %p278 = pneg %p84
        %p279 = pneg %p81
        %p280 = pneg %p105
        %p281 = pneg %p102
        %p282 = pneg %p126
        %p283 = pneg %p123
        %p284 = pneg %p147
        %p285 = pneg %p144
        %p286 = pneg %p168
        %p287 = pneg %p165
        %p288 = pneg %p194
        %p289 = pneg %p191
        %p290 = scmp.lt.s32.totalorder %s21, 1
        %s291 = scalar_select %p290, %s21, 1
        %s292 = smul.addr %s291, 8
        %s293 = scalar_lea.vmem %s7, %s292
        %s294 = smul.u32 8, %s21
        %p295 = scmp.lt.s32.totalorder %s21, 1
        %s296 = scalar_select %p295, %s21, 1
        %s297 = smul.addr %s296, 8
        %s298 = scalar_lea.vmem %s7, %s297
        %v301 = vld [vmem:[%s264] sm:$0xf]
        %v302 = vld [vmem:[%s264 + $0x4] sm:$0xf]
        %v303 = vld [vmem:[%s264 + $0x8] sm:$0xf]
        %v304 = vld [vmem:[%s264 + $0xc] sm:$0xf]
        %v305 = vld [vmem:[%s264 + $0x10] sm:$0xf]
        %v306 = vld [vmem:[%s264 + $0x14] sm:$0xf]
        %v307 = vld [vmem:[%s264 + $0x18] sm:$0xf]
        %v308 = vld [vmem:[%s264 + $0x1c] sm:$0xf]
        %v309 = vld [vmem:[%s264 + $0x20] sm:$0xf]
        %v310 = vld [vmem:[%s264 + $0x24] sm:$0xf]
        %v311 = vld [vmem:[%s264 + $0x28] sm:$0xf]
        %v312 = vld [vmem:[%s264 + $0x2c] sm:$0xf]
        %v313 = vld [vmem:[%s264 + $0x30] sm:$0xf]
        %v314 = vld [vmem:[%s264 + $0x34] sm:$0xf]
        %v315 = vld [vmem:[%s264 + $0x38] sm:$0xf]
        %v316 = vld [vmem:[%s264 + $0x3c] sm:$0xf]
        %v319 = vunpack.c.l.b16 %v301
        %v320 = vunpack.c.l.b16 %v302
        %v321 = vpack.c.b16 %v320, %v319
        %vm322 = vcmask 130048
        %v324 = vsel %vm322, %v321, 0
        %326 = vmatprep.subr.bf16.mxu0 0
        %327 = vmatpush1.bf16.msra.mxu0 0
        %328 = vmatprep.subr.bf16.mxu0 0
        %329 = vmatpush1.bf16.msra.mxu0 0
        %330 = vmatprep.subr.bf16.mxu0 0
        %331 = vmatpush1.bf16.msra.mxu0 0
        %332 = vmatprep.subr.bf16.mxu0 0
        %333 = vmatpush1.bf16.msra.mxu0 0
        %334 = vmatprep.subr.bf16.mxu0 0
        %335 = vmatpush1.bf16.msra.mxu0 0
        %336 = vmatprep.subr.bf16.mxu0 0
        %337 = vmatpush1.bf16.msra.mxu0 0
        %338 = vmatprep.subr.bf16.mxu0 0
        %339 = vmatpush1.bf16.msra.mxu0 0
        %340 = vmatprep.subr.bf16.mxu0 0
        %341 = vmatpush1.bf16.msra.mxu0 1065369472
        %342 = vmatprep.subr.bf16.mxu0 0
        %343 = vmatpush2.bf16.msra.mxu0 0
        %344 = vmatprep.subr.bf16.mxu0 0
        %345 = vmatpush2.bf16.msra.mxu0 0
        %346 = vmatprep.subr.bf16.mxu0 0
        %347 = vmatpush2.bf16.msra.mxu0 0
        %348 = vmatprep.subr.bf16.mxu0 0
        %349 = vmatpush2.bf16.msra.mxu0 0
        %350 = vmatprep.subr.bf16.mxu0 0
        %351 = vmatpush2.bf16.msra.mxu0 0
        %352 = vmatprep.subr.bf16.mxu0 0
        %353 = vmatpush2.bf16.msra.mxu0 0
        %354 = vmatprep.subr.bf16.mxu0 0
        %355 = vmatpush2.bf16.msra.mxu0 0
        %356 = vmatprep.subr.bf16.mxu0 0
        %357 = vmatpush2.bf16.msra.mxu0 0
        %358 = vmatprep.mubr.bf16.mxu0 0
        %359 = vmatmul.mubr.bf16.gmra.mxu0 %v324
        %v360 = vpop.f32.mrf.mxu0
        %v361 = vadd.f32 0.0, %v360
        %v362 = vpop.f32.mrf.mxu0
        %v363 = vpop.f32.mrf.mxu0
        %v364 = vadd.f32 0.0, %v363
        %v365 = vpop.f32.mrf.mxu0
        %366 = vdwg.mxu0
        %v369 = vunpack.c.l.b16 %v303
        %v370 = vunpack.c.l.b16 %v304
        %v371 = vpack.c.b16 %v370, %v369
        %v373 = vsel %vm322, %v371, 0
        %375 = vmatprep.subr.bf16.mxu0 0
        %376 = vmatpush1.bf16.msra.mxu0 0
        %377 = vmatprep.subr.bf16.mxu0 0
        %378 = vmatpush1.bf16.msra.mxu0 0
        %379 = vmatprep.subr.bf16.mxu0 0
        %380 = vmatpush1.bf16.msra.mxu0 0
        %381 = vmatprep.subr.bf16.mxu0 0
        %382 = vmatpush1.bf16.msra.mxu0 0
        %383 = vmatprep.subr.bf16.mxu0 0
        %384 = vmatpush1.bf16.msra.mxu0 0
        %385 = vmatprep.subr.bf16.mxu0 0
        %386 = vmatpush1.bf16.msra.mxu0 0
        %387 = vmatprep.subr.bf16.mxu0 0
        %388 = vmatpush1.bf16.msra.mxu0 0
        %389 = vmatprep.subr.bf16.mxu0 0
        %390 = vmatpush1.bf16.msra.mxu0 1065369472
        %391 = vmatprep.subr.bf16.mxu0 0
        %392 = vmatpush2.bf16.msra.mxu0 0
        %393 = vmatprep.subr.bf16.mxu0 0
        %394 = vmatpush2.bf16.msra.mxu0 0
        %395 = vmatprep.subr.bf16.mxu0 0
        %396 = vmatpush2.bf16.msra.mxu0 0
        %397 = vmatprep.subr.bf16.mxu0 0
        %398 = vmatpush2.bf16.msra.mxu0 0
        %399 = vmatprep.subr.bf16.mxu0 0
        %400 = vmatpush2.bf16.msra.mxu0 0
        %401 = vmatprep.subr.bf16.mxu0 0
        %402 = vmatpush2.bf16.msra.mxu0 0
        %403 = vmatprep.subr.bf16.mxu0 0
        %404 = vmatpush2.bf16.msra.mxu0 0
        %405 = vmatprep.subr.bf16.mxu0 0
        %406 = vmatpush2.bf16.msra.mxu0 0
        %407 = vmatprep.mubr.bf16.mxu0 0
        %408 = vmatmul.mubr.bf16.gmra.mxu0 %v373
        %v409 = vpop.f32.mrf.mxu0
        %v410 = vadd.f32 0.0, %v409
        %v411 = vpop.f32.mrf.mxu0
        %v412 = vpop.f32.mrf.mxu0
        %v413 = vadd.f32 0.0, %v412
        %v414 = vpop.f32.mrf.mxu0
        %415 = vdwg.mxu0
        %v418 = vunpack.c.l.b16 %v305
        %v419 = vunpack.c.l.b16 %v306
        %v420 = vpack.c.b16 %v419, %v418
        %v422 = vsel %vm322, %v420, 0
        %424 = vmatprep.subr.bf16.mxu0 0
        %425 = vmatpush1.bf16.msra.mxu0 0
        %426 = vmatprep.subr.bf16.mxu0 0
        %427 = vmatpush1.bf16.msra.mxu0 0
        %428 = vmatprep.subr.bf16.mxu0 0
        %429 = vmatpush1.bf16.msra.mxu0 0
        %430 = vmatprep.subr.bf16.mxu0 0
        %431 = vmatpush1.bf16.msra.mxu0 0
        %432 = vmatprep.subr.bf16.mxu0 0
        %433 = vmatpush1.bf16.msra.mxu0 0
        %434 = vmatprep.subr.bf16.mxu0 0
        %435 = vmatpush1.bf16.msra.mxu0 0
        %436 = vmatprep.subr.bf16.mxu0 0
        %437 = vmatpush1.bf16.msra.mxu0 0
        %438 = vmatprep.subr.bf16.mxu0 0
        %439 = vmatpush1.bf16.msra.mxu0 1065369472
        %440 = vmatprep.subr.bf16.mxu0 0
        %441 = vmatpush2.bf16.msra.mxu0 0
        %442 = vmatprep.subr.bf16.mxu0 0
        %443 = vmatpush2.bf16.msra.mxu0 0
        %444 = vmatprep.subr.bf16.mxu0 0
        %445 = vmatpush2.bf16.msra.mxu0 0
        %446 = vmatprep.subr.bf16.mxu0 0
        %447 = vmatpush2.bf16.msra.mxu0 0
        %448 = vmatprep.subr.bf16.mxu0 0
        %449 = vmatpush2.bf16.msra.mxu0 0
        %450 = vmatprep.subr.bf16.mxu0 0
        %451 = vmatpush2.bf16.msra.mxu0 0
        %452 = vmatprep.subr.bf16.mxu0 0
        %453 = vmatpush2.bf16.msra.mxu0 0
        %454 = vmatprep.subr.bf16.mxu0 0
        %455 = vmatpush2.bf16.msra.mxu0 0
        %456 = vmatprep.mubr.bf16.mxu0 0
        %457 = vmatmul.mubr.bf16.gmra.mxu0 %v422
        %v458 = vpop.f32.mrf.mxu0
        %v459 = vadd.f32 0.0, %v458
        %v460 = vpop.f32.mrf.mxu0
        %v461 = vpop.f32.mrf.mxu0
        %v462 = vadd.f32 0.0, %v461
        %v463 = vpop.f32.mrf.mxu0
        %464 = vdwg.mxu0
        %v467 = vunpack.c.l.b16 %v307
        %v468 = vunpack.c.l.b16 %v308
        %v469 = vpack.c.b16 %v468, %v467
        %v471 = vsel %vm322, %v469, 0
        %473 = vmatprep.subr.bf16.mxu0 0
        %474 = vmatpush1.bf16.msra.mxu0 0
        %475 = vmatprep.subr.bf16.mxu0 0
        %476 = vmatpush1.bf16.msra.mxu0 0
        %477 = vmatprep.subr.bf16.mxu0 0
        %478 = vmatpush1.bf16.msra.mxu0 0
        %479 = vmatprep.subr.bf16.mxu0 0
        %480 = vmatpush1.bf16.msra.mxu0 0
        %481 = vmatprep.subr.bf16.mxu0 0
        %482 = vmatpush1.bf16.msra.mxu0 0
        %483 = vmatprep.subr.bf16.mxu0 0
        %484 = vmatpush1.bf16.msra.mxu0 0
        %485 = vmatprep.subr.bf16.mxu0 0
        %486 = vmatpush1.bf16.msra.mxu0 0
        %487 = vmatprep.subr.bf16.mxu0 0
        %488 = vmatpush1.bf16.msra.mxu0 1065369472
        %489 = vmatprep.subr.bf16.mxu0 0
        %490 = vmatpush2.bf16.msra.mxu0 0
        %491 = vmatprep.subr.bf16.mxu0 0
        %492 = vmatpush2.bf16.msra.mxu0 0
        %493 = vmatprep.subr.bf16.mxu0 0
        %494 = vmatpush2.bf16.msra.mxu0 0
        %495 = vmatprep.subr.bf16.mxu0 0
        %496 = vmatpush2.bf16.msra.mxu0 0
        %497 = vmatprep.subr.bf16.mxu0 0
        %498 = vmatpush2.bf16.msra.mxu0 0
        %499 = vmatprep.subr.bf16.mxu0 0
        %500 = vmatpush2.bf16.msra.mxu0 0
        %501 = vmatprep.subr.bf16.mxu0 0
        %502 = vmatpush2.bf16.msra.mxu0 0
        %503 = vmatprep.subr.bf16.mxu0 0
        %504 = vmatpush2.bf16.msra.mxu0 0
        %505 = vmatprep.mubr.bf16.mxu0 0
        %506 = vmatmul.mubr.bf16.gmra.mxu0 %v471
        %v507 = vpop.f32.mrf.mxu0
        %v508 = vadd.f32 0.0, %v507
        %v509 = vpop.f32.mrf.mxu0
        %v510 = vpop.f32.mrf.mxu0
        %v511 = vadd.f32 0.0, %v510
        %v512 = vpop.f32.mrf.mxu0
        %513 = vdwg.mxu0
        %v516 = vunpack.c.l.b16 %v309
        %v517 = vunpack.c.l.b16 %v310
        %v518 = vpack.c.b16 %v517, %v516
        %v520 = vsel %vm322, %v518, 0
        %522 = vmatprep.subr.bf16.mxu0 0
        %523 = vmatpush1.bf16.msra.mxu0 0
        %524 = vmatprep.subr.bf16.mxu0 0
        %525 = vmatpush1.bf16.msra.mxu0 0
        %526 = vmatprep.subr.bf16.mxu0 0
        %527 = vmatpush1.bf16.msra.mxu0 0
        %528 = vmatprep.subr.bf16.mxu0 0
        %529 = vmatpush1.bf16.msra.mxu0 0
        %530 = vmatprep.subr.bf16.mxu0 0
        %531 = vmatpush1.bf16.msra.mxu0 0
        %532 = vmatprep.subr.bf16.mxu0 0
        %533 = vmatpush1.bf16.msra.mxu0 0
        %534 = vmatprep.subr.bf16.mxu0 0
        %535 = vmatpush1.bf16.msra.mxu0 0
        %536 = vmatprep.subr.bf16.mxu0 0
        %537 = vmatpush1.bf16.msra.mxu0 1065369472
        %538 = vmatprep.subr.bf16.mxu0 0
        %539 = vmatpush2.bf16.msra.mxu0 0
        %540 = vmatprep.subr.bf16.mxu0 0
        %541 = vmatpush2.bf16.msra.mxu0 0
        %542 = vmatprep.subr.bf16.mxu0 0
        %543 = vmatpush2.bf16.msra.mxu0 0
        %544 = vmatprep.subr.bf16.mxu0 0
        %545 = vmatpush2.bf16.msra.mxu0 0
        %546 = vmatprep.subr.bf16.mxu0 0
        %547 = vmatpush2.bf16.msra.mxu0 0
        %548 = vmatprep.subr.bf16.mxu0 0
        %549 = vmatpush2.bf16.msra.mxu0 0
        %550 = vmatprep.subr.bf16.mxu0 0
        %551 = vmatpush2.bf16.msra.mxu0 0
        %552 = vmatprep.subr.bf16.mxu0 0
        %553 = vmatpush2.bf16.msra.mxu0 0
        %554 = vmatprep.mubr.bf16.mxu0 0
        %555 = vmatmul.mubr.bf16.gmra.mxu0 %v520
        %v556 = vpop.f32.mrf.mxu0
        %v557 = vadd.f32 0.0, %v556
        %v558 = vpop.f32.mrf.mxu0
        %v559 = vpop.f32.mrf.mxu0
        %v560 = vadd.f32 0.0, %v559
        %v561 = vpop.f32.mrf.mxu0
        %562 = vdwg.mxu0
        %v565 = vunpack.c.l.b16 %v311
        %v566 = vunpack.c.l.b16 %v312
        %v567 = vpack.c.b16 %v566, %v565
        %v569 = vsel %vm322, %v567, 0
        %571 = vmatprep.subr.bf16.mxu0 0
        %572 = vmatpush1.bf16.msra.mxu0 0
        %573 = vmatprep.subr.bf16.mxu0 0
        %574 = vmatpush1.bf16.msra.mxu0 0
        %575 = vmatprep.subr.bf16.mxu0 0
        %576 = vmatpush1.bf16.msra.mxu0 0
        %577 = vmatprep.subr.bf16.mxu0 0
        %578 = vmatpush1.bf16.msra.mxu0 0
        %579 = vmatprep.subr.bf16.mxu0 0
        %580 = vmatpush1.bf16.msra.mxu0 0
        %581 = vmatprep.subr.bf16.mxu0 0
        %582 = vmatpush1.bf16.msra.mxu0 0
        %583 = vmatprep.subr.bf16.mxu0 0
        %584 = vmatpush1.bf16.msra.mxu0 0
        %585 = vmatprep.subr.bf16.mxu0 0
        %586 = vmatpush1.bf16.msra.mxu0 1065369472
        %587 = vmatprep.subr.bf16.mxu0 0
        %588 = vmatpush2.bf16.msra.mxu0 0
        %589 = vmatprep.subr.bf16.mxu0 0
        %590 = vmatpush2.bf16.msra.mxu0 0
        %591 = vmatprep.subr.bf16.mxu0 0
        %592 = vmatpush2.bf16.msra.mxu0 0
        %593 = vmatprep.subr.bf16.mxu0 0
        %594 = vmatpush2.bf16.msra.mxu0 0
        %595 = vmatprep.subr.bf16.mxu0 0
        %596 = vmatpush2.bf16.msra.mxu0 0
        %597 = vmatprep.subr.bf16.mxu0 0
        %598 = vmatpush2.bf16.msra.mxu0 0
        %599 = vmatprep.subr.bf16.mxu0 0
        %600 = vmatpush2.bf16.msra.mxu0 0
        %601 = vmatprep.subr.bf16.mxu0 0
        %602 = vmatpush2.bf16.msra.mxu0 0
        %603 = vmatprep.mubr.bf16.mxu0 0
        %604 = vmatmul.mubr.bf16.gmra.mxu0 %v569
        %v605 = vpop.f32.mrf.mxu0
        %v606 = vadd.f32 0.0, %v605
        %v607 = vpop.f32.mrf.mxu0
        %v608 = vpop.f32.mrf.mxu0
        %v609 = vadd.f32 0.0, %v608
        %v610 = vpop.f32.mrf.mxu0
        %611 = vdwg.mxu0
        %v614 = vunpack.c.l.b16 %v313
        %v615 = vunpack.c.l.b16 %v314
        %v616 = vpack.c.b16 %v615, %v614
        %v618 = vsel %vm322, %v616, 0
        %620 = vmatprep.subr.bf16.mxu0 0
        %621 = vmatpush1.bf16.msra.mxu0 0
        %622 = vmatprep.subr.bf16.mxu0 0
        %623 = vmatpush1.bf16.msra.mxu0 0
        %624 = vmatprep.subr.bf16.mxu0 0
        %625 = vmatpush1.bf16.msra.mxu0 0
        %626 = vmatprep.subr.bf16.mxu0 0
        %627 = vmatpush1.bf16.msra.mxu0 0
        %628 = vmatprep.subr.bf16.mxu0 0
        %629 = vmatpush1.bf16.msra.mxu0 0
        %630 = vmatprep.subr.bf16.mxu0 0
        %631 = vmatpush1.bf16.msra.mxu0 0
        %632 = vmatprep.subr.bf16.mxu0 0
        %633 = vmatpush1.bf16.msra.mxu0 0
        %634 = vmatprep.subr.bf16.mxu0 0
        %635 = vmatpush1.bf16.msra.mxu0 1065369472
        %636 = vmatprep.subr.bf16.mxu0 0
        %637 = vmatpush2.bf16.msra.mxu0 0
        %638 = vmatprep.subr.bf16.mxu0 0
        %639 = vmatpush2.bf16.msra.mxu0 0
        %640 = vmatprep.subr.bf16.mxu0 0
        %641 = vmatpush2.bf16.msra.mxu0 0
        %642 = vmatprep.subr.bf16.mxu0 0
        %643 = vmatpush2.bf16.msra.mxu0 0
        %644 = vmatprep.subr.bf16.mxu0 0
        %645 = vmatpush2.bf16.msra.mxu0 0
        %646 = vmatprep.subr.bf16.mxu0 0
        %647 = vmatpush2.bf16.msra.mxu0 0
        %648 = vmatprep.subr.bf16.mxu0 0
        %649 = vmatpush2.bf16.msra.mxu0 0
        %650 = vmatprep.subr.bf16.mxu0 0
        %651 = vmatpush2.bf16.msra.mxu0 0
        %652 = vmatprep.mubr.bf16.mxu0 0
        %653 = vmatmul.mubr.bf16.gmra.mxu0 %v618
        %v654 = vpop.f32.mrf.mxu0
        %v655 = vadd.f32 0.0, %v654
        %v656 = vpop.f32.mrf.mxu0
        %v657 = vpop.f32.mrf.mxu0
        %v658 = vadd.f32 0.0, %v657
        %v659 = vpop.f32.mrf.mxu0
        %660 = vdwg.mxu0
        %v663 = vunpack.c.l.b16 %v315
        %v664 = vunpack.c.l.b16 %v316
        %v665 = vpack.c.b16 %v664, %v663
        %v667 = vsel %vm322, %v665, 0
        %669 = vmatprep.subr.bf16.mxu0 0
        %670 = vmatpush1.bf16.msra.mxu0 0
        %671 = vmatprep.subr.bf16.mxu0 0
        %672 = vmatpush1.bf16.msra.mxu0 0
        %673 = vmatprep.subr.bf16.mxu0 0
        %674 = vmatpush1.bf16.msra.mxu0 0
        %675 = vmatprep.subr.bf16.mxu0 0
        %676 = vmatpush1.bf16.msra.mxu0 0
        %677 = vmatprep.subr.bf16.mxu0 0
        %678 = vmatpush1.bf16.msra.mxu0 0
        %679 = vmatprep.subr.bf16.mxu0 0
        %680 = vmatpush1.bf16.msra.mxu0 0
        %681 = vmatprep.subr.bf16.mxu0 0
        %682 = vmatpush1.bf16.msra.mxu0 0
        %683 = vmatprep.subr.bf16.mxu0 0
        %684 = vmatpush1.bf16.msra.mxu0 1065369472
        %685 = vmatprep.subr.bf16.mxu0 0
        %686 = vmatpush2.bf16.msra.mxu0 0
        %687 = vmatprep.subr.bf16.mxu0 0
        %688 = vmatpush2.bf16.msra.mxu0 0
        %689 = vmatprep.subr.bf16.mxu0 0
        %690 = vmatpush2.bf16.msra.mxu0 0
        %691 = vmatprep.subr.bf16.mxu0 0
        %692 = vmatpush2.bf16.msra.mxu0 0
        %693 = vmatprep.subr.bf16.mxu0 0
        %694 = vmatpush2.bf16.msra.mxu0 0
        %695 = vmatprep.subr.bf16.mxu0 0
        %696 = vmatpush2.bf16.msra.mxu0 0
        %697 = vmatprep.subr.bf16.mxu0 0
        %698 = vmatpush2.bf16.msra.mxu0 0
        %699 = vmatprep.subr.bf16.mxu0 0
        %700 = vmatpush2.bf16.msra.mxu0 0
        %701 = vmatprep.mubr.bf16.mxu0 0
        %702 = vmatmul.mubr.bf16.gmra.mxu0 %v667
        %v703 = vpop.f32.mrf.mxu0
        %v704 = vadd.f32 0.0, %v703
        %v705 = vpop.f32.mrf.mxu0
        %v706 = vpop.f32.mrf.mxu0
        %v707 = vadd.f32 0.0, %v706
        %v708 = vpop.f32.mrf.mxu0
        %709 = vdwg.mxu0
        %v712 = vsel %vm322, 1065369472, 0
        %714 = vmatprep.subr.bf16.mxu0 0
        %715 = vmatpush1.bf16.msra.mxu0 0
        %716 = vmatprep.subr.bf16.mxu0 0
        %717 = vmatpush1.bf16.msra.mxu0 0
        %718 = vmatprep.subr.bf16.mxu0 0
        %719 = vmatpush1.bf16.msra.mxu0 0
        %720 = vmatprep.subr.bf16.mxu0 0
        %721 = vmatpush1.bf16.msra.mxu0 0
        %722 = vmatprep.subr.bf16.mxu0 0
        %723 = vmatpush1.bf16.msra.mxu0 0
        %724 = vmatprep.subr.bf16.mxu0 0
        %725 = vmatpush1.bf16.msra.mxu0 0
        %726 = vmatprep.subr.bf16.mxu0 0
        %727 = vmatpush1.bf16.msra.mxu0 0
        %728 = vmatprep.subr.bf16.mxu0 0
        %729 = vmatpush1.bf16.msra.mxu0 %v321
        %730 = vmatprep.subr.bf16.mxu0 0
        %731 = vmatpush2.bf16.msra.mxu0 0
        %732 = vmatprep.subr.bf16.mxu0 0
        %733 = vmatpush2.bf16.msra.mxu0 0
        %734 = vmatprep.subr.bf16.mxu0 0
        %735 = vmatpush2.bf16.msra.mxu0 0
        %736 = vmatprep.subr.bf16.mxu0 0
        %737 = vmatpush2.bf16.msra.mxu0 0
        %738 = vmatprep.subr.bf16.mxu0 0
        %739 = vmatpush2.bf16.msra.mxu0 0
        %740 = vmatprep.subr.bf16.mxu0 0
        %741 = vmatpush2.bf16.msra.mxu0 0
        %742 = vmatprep.subr.bf16.mxu0 0
        %743 = vmatpush2.bf16.msra.mxu0 0
        %744 = vmatprep.subr.bf16.mxu0 0
        %745 = vmatpush2.bf16.msra.mxu0 0
        %746 = vmatprep.mubr.bf16.mxu0 0
        %747 = vmatmul.mubr.bf16.gmra.mxu0 %v712
        %v748 = vpop.f32.mrf.mxu0
        %v749 = vadd.f32 0.0, %v748
        %v750 = vpop.f32.mrf.mxu0
        %v751 = vpop.f32.mrf.mxu0
        %v752 = vpop.f32.mrf.mxu0
        %753 = vdwg.mxu0
        %755 = vmatprep.subr.bf16.mxu0 0
        %756 = vmatpush1.bf16.msra.mxu0 0
        %757 = vmatprep.subr.bf16.mxu0 0
        %758 = vmatpush1.bf16.msra.mxu0 0
        %759 = vmatprep.subr.bf16.mxu0 0
        %760 = vmatpush1.bf16.msra.mxu0 0
        %761 = vmatprep.subr.bf16.mxu0 0
        %762 = vmatpush1.bf16.msra.mxu0 0
        %763 = vmatprep.subr.bf16.mxu0 0
        %764 = vmatpush1.bf16.msra.mxu0 0
        %765 = vmatprep.subr.bf16.mxu0 0
        %766 = vmatpush1.bf16.msra.mxu0 0
        %767 = vmatprep.subr.bf16.mxu0 0
        %768 = vmatpush1.bf16.msra.mxu0 0
        %769 = vmatprep.subr.bf16.mxu0 0
        %770 = vmatpush1.bf16.msra.mxu0 %v371
        %771 = vmatprep.subr.bf16.mxu0 0
        %772 = vmatpush2.bf16.msra.mxu0 0
        %773 = vmatprep.subr.bf16.mxu0 0
        %774 = vmatpush2.bf16.msra.mxu0 0
        %775 = vmatprep.subr.bf16.mxu0 0
        %776 = vmatpush2.bf16.msra.mxu0 0
        %777 = vmatprep.subr.bf16.mxu0 0
        %778 = vmatpush2.bf16.msra.mxu0 0
        %779 = vmatprep.subr.bf16.mxu0 0
        %780 = vmatpush2.bf16.msra.mxu0 0
        %781 = vmatprep.subr.bf16.mxu0 0
        %782 = vmatpush2.bf16.msra.mxu0 0
        %783 = vmatprep.subr.bf16.mxu0 0
        %784 = vmatpush2.bf16.msra.mxu0 0
        %785 = vmatprep.subr.bf16.mxu0 0
        %786 = vmatpush2.bf16.msra.mxu0 0
        %787 = vmatprep.mubr.bf16.mxu0 0
        %788 = vmatmul.mubr.bf16.gmra.mxu0 %v712
        %v789 = vpop.f32.mrf.mxu0
        %v790 = vadd.f32 0.0, %v789
        %v791 = vpop.f32.mrf.mxu0
        %v792 = vpop.f32.mrf.mxu0
        %v793 = vpop.f32.mrf.mxu0
        %794 = vdwg.mxu0
        %796 = vmatprep.subr.bf16.mxu0 0
        %797 = vmatpush1.bf16.msra.mxu0 0
        %798 = vmatprep.subr.bf16.mxu0 0
        %799 = vmatpush1.bf16.msra.mxu0 0
        %800 = vmatprep.subr.bf16.mxu0 0
        %801 = vmatpush1.bf16.msra.mxu0 0
        %802 = vmatprep.subr.bf16.mxu0 0
        %803 = vmatpush1.bf16.msra.mxu0 0
        %804 = vmatprep.subr.bf16.mxu0 0
        %805 = vmatpush1.bf16.msra.mxu0 0
        %806 = vmatprep.subr.bf16.mxu0 0
        %807 = vmatpush1.bf16.msra.mxu0 0
        %808 = vmatprep.subr.bf16.mxu0 0
        %809 = vmatpush1.bf16.msra.mxu0 0
        %810 = vmatprep.subr.bf16.mxu0 0
        %811 = vmatpush1.bf16.msra.mxu0 %v420
        %812 = vmatprep.subr.bf16.mxu0 0
        %813 = vmatpush2.bf16.msra.mxu0 0
        %814 = vmatprep.subr.bf16.mxu0 0
        %815 = vmatpush2.bf16.msra.mxu0 0
        %816 = vmatprep.subr.bf16.mxu0 0
        %817 = vmatpush2.bf16.msra.mxu0 0
        %818 = vmatprep.subr.bf16.mxu0 0
        %819 = vmatpush2.bf16.msra.mxu0 0
        %820 = vmatprep.subr.bf16.mxu0 0
        %821 = vmatpush2.bf16.msra.mxu0 0
        %822 = vmatprep.subr.bf16.mxu0 0
        %823 = vmatpush2.bf16.msra.mxu0 0
        %824 = vmatprep.subr.bf16.mxu0 0
        %825 = vmatpush2.bf16.msra.mxu0 0
        %826 = vmatprep.subr.bf16.mxu0 0
        %827 = vmatpush2.bf16.msra.mxu0 0
        %828 = vmatprep.mubr.bf16.mxu0 0
        %829 = vmatmul.mubr.bf16.gmra.mxu0 %v712
        %v830 = vpop.f32.mrf.mxu0
        %v831 = vadd.f32 0.0, %v830
        %v832 = vpop.f32.mrf.mxu0
        %v833 = vpop.f32.mrf.mxu0
        %v834 = vpop.f32.mrf.mxu0
        %835 = vdwg.mxu0
        %837 = vmatprep.subr.bf16.mxu0 0
        %838 = vmatpush1.bf16.msra.mxu0 0
        %839 = vmatprep.subr.bf16.mxu0 0
        %840 = vmatpush1.bf16.msra.mxu0 0
        %841 = vmatprep.subr.bf16.mxu0 0
        %842 = vmatpush1.bf16.msra.mxu0 0
        %843 = vmatprep.subr.bf16.mxu0 0
        %844 = vmatpush1.bf16.msra.mxu0 0
        %845 = vmatprep.subr.bf16.mxu0 0
        %846 = vmatpush1.bf16.msra.mxu0 0
        %847 = vmatprep.subr.bf16.mxu0 0
        %848 = vmatpush1.bf16.msra.mxu0 0
        %849 = vmatprep.subr.bf16.mxu0 0
        %850 = vmatpush1.bf16.msra.mxu0 0
        %851 = vmatprep.subr.bf16.mxu0 0
        %852 = vmatpush1.bf16.msra.mxu0 %v469
        %853 = vmatprep.subr.bf16.mxu0 0
        %854 = vmatpush2.bf16.msra.mxu0 0
        %855 = vmatprep.subr.bf16.mxu0 0
        %856 = vmatpush2.bf16.msra.mxu0 0
        %857 = vmatprep.subr.bf16.mxu0 0
        %858 = vmatpush2.bf16.msra.mxu0 0
        %859 = vmatprep.subr.bf16.mxu0 0
        %860 = vmatpush2.bf16.msra.mxu0 0
        %861 = vmatprep.subr.bf16.mxu0 0
        %862 = vmatpush2.bf16.msra.mxu0 0
        %863 = vmatprep.subr.bf16.mxu0 0
        %864 = vmatpush2.bf16.msra.mxu0 0
        %865 = vmatprep.subr.bf16.mxu0 0
        %866 = vmatpush2.bf16.msra.mxu0 0
        %867 = vmatprep.subr.bf16.mxu0 0
        %868 = vmatpush2.bf16.msra.mxu0 0
        %869 = vmatprep.mubr.bf16.mxu0 0
        %870 = vmatmul.mubr.bf16.gmra.mxu0 %v712
        %v871 = vpop.f32.mrf.mxu0
        %v872 = vadd.f32 0.0, %v871
        %v873 = vpop.f32.mrf.mxu0
        %v874 = vpop.f32.mrf.mxu0
        %v875 = vpop.f32.mrf.mxu0
        %876 = vdwg.mxu0
        %878 = vmatprep.subr.bf16.mxu0 0
        %879 = vmatpush1.bf16.msra.mxu0 0
        %880 = vmatprep.subr.bf16.mxu0 0
        %881 = vmatpush1.bf16.msra.mxu0 0
        %882 = vmatprep.subr.bf16.mxu0 0
        %883 = vmatpush1.bf16.msra.mxu0 0
        %884 = vmatprep.subr.bf16.mxu0 0
        %885 = vmatpush1.bf16.msra.mxu0 0
        %886 = vmatprep.subr.bf16.mxu0 0
        %887 = vmatpush1.bf16.msra.mxu0 0
        %888 = vmatprep.subr.bf16.mxu0 0
        %889 = vmatpush1.bf16.msra.mxu0 0
        %890 = vmatprep.subr.bf16.mxu0 0
        %891 = vmatpush1.bf16.msra.mxu0 0
        %892 = vmatprep.subr.bf16.mxu0 0
        %893 = vmatpush1.bf16.msra.mxu0 %v518
        %894 = vmatprep.subr.bf16.mxu0 0
        %895 = vmatpush2.bf16.msra.mxu0 0
        %896 = vmatprep.subr.bf16.mxu0 0
        %897 = vmatpush2.bf16.msra.mxu0 0
        %898 = vmatprep.subr.bf16.mxu0 0
        %899 = vmatpush2.bf16.msra.mxu0 0
        %900 = vmatprep.subr.bf16.mxu0 0
        %901 = vmatpush2.bf16.msra.mxu0 0
        %902 = vmatprep.subr.bf16.mxu0 0
        %903 = vmatpush2.bf16.msra.mxu0 0
        %904 = vmatprep.subr.bf16.mxu0 0
        %905 = vmatpush2.bf16.msra.mxu0 0
        %906 = vmatprep.subr.bf16.mxu0 0
        %907 = vmatpush2.bf16.msra.mxu0 0
        %908 = vmatprep.subr.bf16.mxu0 0
        %909 = vmatpush2.bf16.msra.mxu0 0
        %910 = vmatprep.mubr.bf16.mxu0 0
        %911 = vmatmul.mubr.bf16.gmra.mxu0 %v712
        %v912 = vpop.f32.mrf.mxu0
        %v913 = vadd.f32 0.0, %v912
        %v914 = vpop.f32.mrf.mxu0
        %v915 = vpop.f32.mrf.mxu0
        %v916 = vpop.f32.mrf.mxu0
        %917 = vdwg.mxu0
        %919 = vmatprep.subr.bf16.mxu0 0
        %920 = vmatpush1.bf16.msra.mxu0 0
        %921 = vmatprep.subr.bf16.mxu0 0
        %922 = vmatpush1.bf16.msra.mxu0 0
        %923 = vmatprep.subr.bf16.mxu0 0
        %924 = vmatpush1.bf16.msra.mxu0 0
        %925 = vmatprep.subr.bf16.mxu0 0
        %926 = vmatpush1.bf16.msra.mxu0 0
        %927 = vmatprep.subr.bf16.mxu0 0
        %928 = vmatpush1.bf16.msra.mxu0 0
        %929 = vmatprep.subr.bf16.mxu0 0
        %930 = vmatpush1.bf16.msra.mxu0 0
        %931 = vmatprep.subr.bf16.mxu0 0
        %932 = vmatpush1.bf16.msra.mxu0 0
        %933 = vmatprep.subr.bf16.mxu0 0
        %934 = vmatpush1.bf16.msra.mxu0 %v567
        %935 = vmatprep.subr.bf16.mxu0 0
        %936 = vmatpush2.bf16.msra.mxu0 0
        %937 = vmatprep.subr.bf16.mxu0 0
        %938 = vmatpush2.bf16.msra.mxu0 0
        %939 = vmatprep.subr.bf16.mxu0 0
        %940 = vmatpush2.bf16.msra.mxu0 0
        %941 = vmatprep.subr.bf16.mxu0 0
        %942 = vmatpush2.bf16.msra.mxu0 0
        %943 = vmatprep.subr.bf16.mxu0 0
        %944 = vmatpush2.bf16.msra.mxu0 0
        %945 = vmatprep.subr.bf16.mxu0 0
        %946 = vmatpush2.bf16.msra.mxu0 0
        %947 = vmatprep.subr.bf16.mxu0 0
        %948 = vmatpush2.bf16.msra.mxu0 0
        %949 = vmatprep.subr.bf16.mxu0 0
        %950 = vmatpush2.bf16.msra.mxu0 0
        %951 = vmatprep.mubr.bf16.mxu0 0
        %952 = vmatmul.mubr.bf16.gmra.mxu0 %v712
        %v953 = vpop.f32.mrf.mxu0
        %v954 = vadd.f32 0.0, %v953
        %v955 = vpop.f32.mrf.mxu0
        %v956 = vpop.f32.mrf.mxu0
        %v957 = vpop.f32.mrf.mxu0
        %958 = vdwg.mxu0
        %960 = vmatprep.subr.bf16.mxu0 0
        %961 = vmatpush1.bf16.msra.mxu0 0
        %962 = vmatprep.subr.bf16.mxu0 0
        %963 = vmatpush1.bf16.msra.mxu0 0
        %964 = vmatprep.subr.bf16.mxu0 0
        %965 = vmatpush1.bf16.msra.mxu0 0
        %966 = vmatprep.subr.bf16.mxu0 0
        %967 = vmatpush1.bf16.msra.mxu0 0
        %968 = vmatprep.subr.bf16.mxu0 0
        %969 = vmatpush1.bf16.msra.mxu0 0
        %970 = vmatprep.subr.bf16.mxu0 0
        %971 = vmatpush1.bf16.msra.mxu0 0
        %972 = vmatprep.subr.bf16.mxu0 0
        %973 = vmatpush1.bf16.msra.mxu0 0
        %974 = vmatprep.subr.bf16.mxu0 0
        %975 = vmatpush1.bf16.msra.mxu0 %v616
        %976 = vmatprep.subr.bf16.mxu0 0
        %977 = vmatpush2.bf16.msra.mxu0 0
        %978 = vmatprep.subr.bf16.mxu0 0
        %979 = vmatpush2.bf16.msra.mxu0 0
        %980 = vmatprep.subr.bf16.mxu0 0
        %981 = vmatpush2.bf16.msra.mxu0 0
        %982 = vmatprep.subr.bf16.mxu0 0
        %983 = vmatpush2.bf16.msra.mxu0 0
        %984 = vmatprep.subr.bf16.mxu0 0
        %985 = vmatpush2.bf16.msra.mxu0 0
        %986 = vmatprep.subr.bf16.mxu0 0
        %987 = vmatpush2.bf16.msra.mxu0 0
        %988 = vmatprep.subr.bf16.mxu0 0
        %989 = vmatpush2.bf16.msra.mxu0 0
        %990 = vmatprep.subr.bf16.mxu0 0
        %991 = vmatpush2.bf16.msra.mxu0 0
        %992 = vmatprep.mubr.bf16.mxu0 0
        %993 = vmatmul.mubr.bf16.gmra.mxu0 %v712
        %v994 = vpop.f32.mrf.mxu0
        %v995 = vadd.f32 0.0, %v994
        %v996 = vpop.f32.mrf.mxu0
        %v997 = vpop.f32.mrf.mxu0
        %v998 = vpop.f32.mrf.mxu0
        %999 = vdwg.mxu0
        %1001 = vmatprep.subr.bf16.mxu0 0
        %1002 = vmatpush1.bf16.msra.mxu0 0
        %1003 = vmatprep.subr.bf16.mxu0 0
        %1004 = vmatpush1.bf16.msra.mxu0 0
        %1005 = vmatprep.subr.bf16.mxu0 0
        %1006 = vmatpush1.bf16.msra.mxu0 0
        %1007 = vmatprep.subr.bf16.mxu0 0
        %1008 = vmatpush1.bf16.msra.mxu0 0
        %1009 = vmatprep.subr.bf16.mxu0 0
        %1010 = vmatpush1.bf16.msra.mxu0 0
        %1011 = vmatprep.subr.bf16.mxu0 0
        %1012 = vmatpush1.bf16.msra.mxu0 0
        %1013 = vmatprep.subr.bf16.mxu0 0
        %1014 = vmatpush1.bf16.msra.mxu0 0
        %1015 = vmatprep.subr.bf16.mxu0 0
        %1016 = vmatpush1.bf16.msra.mxu0 %v665
        %1017 = vmatprep.subr.bf16.mxu0 0
        %1018 = vmatpush2.bf16.msra.mxu0 0
        %1019 = vmatprep.subr.bf16.mxu0 0
        %1020 = vmatpush2.bf16.msra.mxu0 0
        %1021 = vmatprep.subr.bf16.mxu0 0
        %1022 = vmatpush2.bf16.msra.mxu0 0
        %1023 = vmatprep.subr.bf16.mxu0 0
        %1024 = vmatpush2.bf16.msra.mxu0 0
        %1025 = vmatprep.subr.bf16.mxu0 0
        %1026 = vmatpush2.bf16.msra.mxu0 0
        %1027 = vmatprep.subr.bf16.mxu0 0
        %1028 = vmatpush2.bf16.msra.mxu0 0
        %1029 = vmatprep.subr.bf16.mxu0 0
        %1030 = vmatpush2.bf16.msra.mxu0 0
        %1031 = vmatprep.subr.bf16.mxu0 0
        %1032 = vmatpush2.bf16.msra.mxu0 0
        %1033 = vmatprep.mubr.bf16.mxu0 0
        %1034 = vmatmul.mubr.bf16.gmra.mxu0 %v712
        %v1035 = vpop.f32.mrf.mxu0
        %v1036 = vadd.f32 0.0, %v1035
        %v1037 = vpop.f32.mrf.mxu0
        %v1038 = vpop.f32.mrf.mxu0
        %v1039 = vpop.f32.mrf.mxu0
        %1040 = vdwg.mxu0
        %vm1041 = vcmp.gt.f32.partialorder %v361, 0.0
        %vm1042 = vcmp.gt.f32.partialorder %v364, 0.0
        %vm1043 = vcmp.gt.f32.partialorder %v410, 0.0
        %vm1044 = vcmp.gt.f32.partialorder %v413, 0.0
        %vm1045 = vcmp.gt.f32.partialorder %v459, 0.0
        %vm1046 = vcmp.gt.f32.partialorder %v462, 0.0
        %vm1047 = vcmp.gt.f32.partialorder %v508, 0.0
        %vm1048 = vcmp.gt.f32.partialorder %v511, 0.0
        %vm1049 = vcmp.gt.f32.partialorder %v557, 0.0
        %vm1050 = vcmp.gt.f32.partialorder %v560, 0.0
        %vm1051 = vcmp.gt.f32.partialorder %v606, 0.0
        %vm1052 = vcmp.gt.f32.partialorder %v609, 0.0
        %vm1053 = vcmp.gt.f32.partialorder %v655, 0.0
        %vm1054 = vcmp.gt.f32.partialorder %v658, 0.0
        %vm1055 = vcmp.gt.f32.partialorder %v704, 0.0
        %vm1056 = vcmp.gt.f32.partialorder %v707, 0.0
        %v1057 = vrsqrt.pop %v361
        %v1058 = vrsqrt.pop %v364
        %v1059 = vrsqrt.pop %v410
        %v1060 = vrsqrt.pop %v413
        %v1061 = vrsqrt.pop %v459
        %v1062 = vrsqrt.pop %v462
        %v1063 = vrsqrt.pop %v508
        %v1064 = vrsqrt.pop %v511
        %v1065 = vrsqrt.pop %v557
        %v1066 = vrsqrt.pop %v560
        %v1067 = vrsqrt.pop %v606
        %v1068 = vrsqrt.pop %v609
        %v1069 = vrsqrt.pop %v655
        %v1070 = vrsqrt.pop %v658
        %v1071 = vrsqrt.pop %v704
        %v1072 = vrsqrt.pop %v707
        %v1073 = vsel %vm1041, %v1057, 0.0
        %v1074 = vsel %vm1042, %v1058, 0.0
        %v1075 = vsel %vm1043, %v1059, 0.0
        %v1076 = vsel %vm1044, %v1060, 0.0
        %v1077 = vsel %vm1045, %v1061, 0.0
        %v1078 = vsel %vm1046, %v1062, 0.0
        %v1079 = vsel %vm1047, %v1063, 0.0
        %v1080 = vsel %vm1048, %v1064, 0.0
        %v1081 = vsel %vm1049, %v1065, 0.0
        %v1082 = vsel %vm1050, %v1066, 0.0
        %v1083 = vsel %vm1051, %v1067, 0.0
        %v1084 = vsel %vm1052, %v1068, 0.0
        %v1085 = vsel %vm1053, %v1069, 0.0
        %v1086 = vsel %vm1054, %v1070, 0.0
        %v1087 = vsel %vm1055, %v1071, 0.0
        %v1088 = vsel %vm1056, %v1072, 0.0
        %vm1089 = vcmp.gt.f32.partialorder %v749, 0.0
        %vm1090 = vcmp.gt.f32.partialorder %v790, 0.0
        %vm1091 = vcmp.gt.f32.partialorder %v831, 0.0
        %vm1092 = vcmp.gt.f32.partialorder %v872, 0.0
        %vm1093 = vcmp.gt.f32.partialorder %v913, 0.0
        %vm1094 = vcmp.gt.f32.partialorder %v954, 0.0
        %vm1095 = vcmp.gt.f32.partialorder %v995, 0.0
        %vm1096 = vcmp.gt.f32.partialorder %v1036, 0.0
        %v1097 = vrsqrt.pop %v749
        %v1098 = vrsqrt.pop %v790
        %v1099 = vrsqrt.pop %v831
        %v1100 = vrsqrt.pop %v872
        %v1101 = vrsqrt.pop %v913
        %v1102 = vrsqrt.pop %v954
        %v1103 = vrsqrt.pop %v995
        %v1104 = vrsqrt.pop %v1036
        %v1105 = vsel %vm1089, %v1097, 0.0
        %v1106 = vsel %vm1090, %v1098, 0.0
        %v1107 = vsel %vm1091, %v1099, 0.0
        %v1108 = vsel %vm1092, %v1100, 0.0
        %v1109 = vsel %vm1093, %v1101, 0.0
        %v1110 = vsel %vm1094, %v1102, 0.0
        %v1111 = vsel %vm1095, %v1103, 0.0
        %v1112 = vsel %vm1096, %v1104, 0.0
        %v1113 = vpack.c.bf16 %v1105, %v1105
        %v1114 = vpack.c.bf16 %v1106, %v1106
        %v1115 = vpack.c.bf16 %v1107, %v1107
        %v1116 = vpack.c.bf16 %v1108, %v1108
        %v1117 = vpack.c.bf16 %v1109, %v1109
        %v1118 = vpack.c.bf16 %v1110, %v1110
        %v1119 = vpack.c.bf16 %v1111, %v1111
        %v1120 = vpack.c.bf16 %v1112, %v1112
        %v1122 = vpack.i.b16 %v1113, %v1113
        %v1124 = vlaneseq
        %v1125 = vshrl.u32 %v1124, 7
        %v1126 = vsub.s32 0, %v1125
        %v1127 = vrot.slane %v1122, %v1126
        %v1129 = vpack.i.b16 %v1114, %v1114
        %v1131 = vlaneseq
        %v1132 = vshrl.u32 %v1131, 7
        %v1133 = vsub.s32 0, %v1132
        %v1134 = vrot.slane %v1129, %v1133
        %v1136 = vpack.i.b16 %v1115, %v1115
        %v1138 = vlaneseq
        %v1139 = vshrl.u32 %v1138, 7
        %v1140 = vsub.s32 0, %v1139
        %v1141 = vrot.slane %v1136, %v1140
        %v1143 = vpack.i.b16 %v1116, %v1116
        %v1145 = vlaneseq
        %v1146 = vshrl.u32 %v1145, 7
        %v1147 = vsub.s32 0, %v1146
        %v1148 = vrot.slane %v1143, %v1147
        %v1150 = vpack.i.b16 %v1117, %v1117
        %v1152 = vlaneseq
        %v1153 = vshrl.u32 %v1152, 7
        %v1154 = vsub.s32 0, %v1153
        %v1155 = vrot.slane %v1150, %v1154
        %v1157 = vpack.i.b16 %v1118, %v1118
        %v1159 = vlaneseq
        %v1160 = vshrl.u32 %v1159, 7
        %v1161 = vsub.s32 0, %v1160
        %v1162 = vrot.slane %v1157, %v1161
        %v1164 = vpack.i.b16 %v1119, %v1119
        %v1166 = vlaneseq
        %v1167 = vshrl.u32 %v1166, 7
        %v1168 = vsub.s32 0, %v1167
        %v1169 = vrot.slane %v1164, %v1168
        %v1171 = vpack.i.b16 %v1120, %v1120
        %v1173 = vlaneseq
        %v1174 = vshrl.u32 %v1173, 7
        %v1175 = vsub.s32 0, %v1174
        %v1176 = vrot.slane %v1171, %v1175
        %v1185 = vunpack.c.l.b16 %v1127
        %v1186 = vunpack.c.l.b16 %v1134
        %v1187 = vunpack.c.l.b16 %v1141
        %v1188 = vunpack.c.l.b16 %v1148
        %v1189 = vunpack.c.l.b16 %v1155
        %v1190 = vunpack.c.l.b16 %v1162
        %v1191 = vunpack.c.l.b16 %v1169
        %v1192 = vunpack.c.l.b16 %v1176
        %v1193 = vpack.c.b16 %v1185, %v1185
        %v1194 = vpack.c.b16 %v1186, %v1186
        %v1195 = vpack.c.b16 %v1187, %v1187
        %v1196 = vpack.c.b16 %v1188, %v1188
        %v1197 = vpack.c.b16 %v1189, %v1189
        %v1198 = vpack.c.b16 %v1190, %v1190
        %v1199 = vpack.c.b16 %v1191, %v1191
        %v1200 = vpack.c.b16 %v1192, %v1192
        %v1209 = vmul.bf16 %v301, %v1193
        %v1210 = vmul.bf16 %v302, %v1193
        %v1211 = vmul.bf16 %v303, %v1194
        %v1212 = vmul.bf16 %v304, %v1194
        %v1213 = vmul.bf16 %v305, %v1195
        %v1214 = vmul.bf16 %v306, %v1195
        %v1215 = vmul.bf16 %v307, %v1196
        %v1216 = vmul.bf16 %v308, %v1196
        %v1217 = vmul.bf16 %v309, %v1197
        %v1218 = vmul.bf16 %v310, %v1197
        %v1219 = vmul.bf16 %v311, %v1198
        %v1220 = vmul.bf16 %v312, %v1198
        %v1221 = vmul.bf16 %v313, %v1199
        %v1222 = vmul.bf16 %v314, %v1199
        %v1223 = vmul.bf16 %v315, %v1200
        %v1224 = vmul.bf16 %v316, %v1200
        %v1225 = vpack.c.bf16 %v364, %v361
        %v1226 = vpack.c.bf16 %v413, %v410
        %v1227 = vpack.c.bf16 %v462, %v459
        %v1228 = vpack.c.bf16 %v511, %v508
        %v1229 = vpack.c.bf16 %v560, %v557
        %v1230 = vpack.c.bf16 %v609, %v606
        %v1231 = vpack.c.bf16 %v658, %v655
        %v1232 = vpack.c.bf16 %v707, %v704
        %v1235 = vunpack.c.l.b16 %v1209
        %v1236 = vunpack.c.l.b16 %v1210
        %v1237 = vpack.c.b16 %v1236, %v1235
        %v1239 = vsel %vm322, %v1237, 0
        %1241 = vmatprep.subr.bf16.mxu0 0
        %1242 = vmatpush1.bf16.msra.mxu0 0
        %1243 = vmatprep.subr.bf16.mxu0 0
        %1244 = vmatpush1.bf16.msra.mxu0 0
        %1245 = vmatprep.subr.bf16.mxu0 0
        %1246 = vmatpush1.bf16.msra.mxu0 0
        %1247 = vmatprep.subr.bf16.mxu0 0
        %1248 = vmatpush1.bf16.msra.mxu0 0
        %1249 = vmatprep.subr.bf16.mxu0 0
        %1250 = vmatpush1.bf16.msra.mxu0 0
        %1251 = vmatprep.subr.bf16.mxu0 0
        %1252 = vmatpush1.bf16.msra.mxu0 0
        %1253 = vmatprep.subr.bf16.mxu0 0
        %1254 = vmatpush1.bf16.msra.mxu0 0
        %1255 = vmatprep.subr.bf16.mxu0 0
        %1256 = vmatpush1.bf16.msra.mxu0 %v1225
        %1257 = vmatprep.subr.bf16.mxu0 0
        %1258 = vmatpush2.bf16.msra.mxu0 0
        %1259 = vmatprep.subr.bf16.mxu0 0
        %1260 = vmatpush2.bf16.msra.mxu0 0
        %1261 = vmatprep.subr.bf16.mxu0 0
        %1262 = vmatpush2.bf16.msra.mxu0 0
        %1263 = vmatprep.subr.bf16.mxu0 0
        %1264 = vmatpush2.bf16.msra.mxu0 0
        %1265 = vmatprep.subr.bf16.mxu0 0
        %1266 = vmatpush2.bf16.msra.mxu0 0
        %1267 = vmatprep.subr.bf16.mxu0 0
        %1268 = vmatpush2.bf16.msra.mxu0 0
        %1269 = vmatprep.subr.bf16.mxu0 0
        %1270 = vmatpush2.bf16.msra.mxu0 0
        %1271 = vmatprep.subr.bf16.mxu0 0
        %1272 = vmatpush2.bf16.msra.mxu0 0
        %1273 = vmatprep.mubr.bf16.mxu0 0
        %1274 = vmatmul.mubr.bf16.gmra.mxu0 %v1239
        %v1275 = vpop.f32.mrf.mxu0
        %v1276 = vadd.f32 0.0, %v1275
        %v1277 = vpop.f32.mrf.mxu0
        %v1278 = vpop.f32.mrf.mxu0
        %v1279 = vadd.f32 0.0, %v1278
        %v1280 = vpop.f32.mrf.mxu0
        %1281 = vdwg.mxu0
        %v1284 = vunpack.c.l.b16 %v1211
        %v1285 = vunpack.c.l.b16 %v1212
        %v1286 = vpack.c.b16 %v1285, %v1284
        %v1288 = vsel %vm322, %v1286, 0
        %1290 = vmatprep.subr.bf16.mxu0 0
        %1291 = vmatpush1.bf16.msra.mxu0 0
        %1292 = vmatprep.subr.bf16.mxu0 0
        %1293 = vmatpush1.bf16.msra.mxu0 0
        %1294 = vmatprep.subr.bf16.mxu0 0
        %1295 = vmatpush1.bf16.msra.mxu0 0
        %1296 = vmatprep.subr.bf16.mxu0 0
        %1297 = vmatpush1.bf16.msra.mxu0 0
        %1298 = vmatprep.subr.bf16.mxu0 0
        %1299 = vmatpush1.bf16.msra.mxu0 0
        %1300 = vmatprep.subr.bf16.mxu0 0
        %1301 = vmatpush1.bf16.msra.mxu0 0
        %1302 = vmatprep.subr.bf16.mxu0 0
        %1303 = vmatpush1.bf16.msra.mxu0 0
        %1304 = vmatprep.subr.bf16.mxu0 0
        %1305 = vmatpush1.bf16.msra.mxu0 %v1226
        %1306 = vmatprep.subr.bf16.mxu0 0
        %1307 = vmatpush2.bf16.msra.mxu0 0
        %1308 = vmatprep.subr.bf16.mxu0 0
        %1309 = vmatpush2.bf16.msra.mxu0 0
        %1310 = vmatprep.subr.bf16.mxu0 0
        %1311 = vmatpush2.bf16.msra.mxu0 0
        %1312 = vmatprep.subr.bf16.mxu0 0
        %1313 = vmatpush2.bf16.msra.mxu0 0
        %1314 = vmatprep.subr.bf16.mxu0 0
        %1315 = vmatpush2.bf16.msra.mxu0 0
        %1316 = vmatprep.subr.bf16.mxu0 0
        %1317 = vmatpush2.bf16.msra.mxu0 0
        %1318 = vmatprep.subr.bf16.mxu0 0
        %1319 = vmatpush2.bf16.msra.mxu0 0
        %1320 = vmatprep.subr.bf16.mxu0 0
        %1321 = vmatpush2.bf16.msra.mxu0 0
        %1322 = vmatprep.mubr.bf16.mxu0 0
        %1323 = vmatmul.mubr.bf16.gmra.mxu0 %v1288
        %v1324 = vpop.f32.mrf.mxu0
        %v1325 = vadd.f32 0.0, %v1324
        %v1326 = vpop.f32.mrf.mxu0
        %v1327 = vpop.f32.mrf.mxu0
        %v1328 = vadd.f32 0.0, %v1327
        %v1329 = vpop.f32.mrf.mxu0
        %1330 = vdwg.mxu0
        %v1333 = vunpack.c.l.b16 %v1213
        %v1334 = vunpack.c.l.b16 %v1214
        %v1335 = vpack.c.b16 %v1334, %v1333
        %v1337 = vsel %vm322, %v1335, 0
        %1339 = vmatprep.subr.bf16.mxu0 0
        %1340 = vmatpush1.bf16.msra.mxu0 0
        %1341 = vmatprep.subr.bf16.mxu0 0
        %1342 = vmatpush1.bf16.msra.mxu0 0
        %1343 = vmatprep.subr.bf16.mxu0 0
        %1344 = vmatpush1.bf16.msra.mxu0 0
        %1345 = vmatprep.subr.bf16.mxu0 0
        %1346 = vmatpush1.bf16.msra.mxu0 0
        %1347 = vmatprep.subr.bf16.mxu0 0
        %1348 = vmatpush1.bf16.msra.mxu0 0
        %1349 = vmatprep.subr.bf16.mxu0 0
        %1350 = vmatpush1.bf16.msra.mxu0 0
        %1351 = vmatprep.subr.bf16.mxu0 0
        %1352 = vmatpush1.bf16.msra.mxu0 0
        %1353 = vmatprep.subr.bf16.mxu0 0
        %1354 = vmatpush1.bf16.msra.mxu0 %v1227
        %1355 = vmatprep.subr.bf16.mxu0 0
        %1356 = vmatpush2.bf16.msra.mxu0 0
        %1357 = vmatprep.subr.bf16.mxu0 0
        %1358 = vmatpush2.bf16.msra.mxu0 0
        %1359 = vmatprep.subr.bf16.mxu0 0
        %1360 = vmatpush2.bf16.msra.mxu0 0
        %1361 = vmatprep.subr.bf16.mxu0 0
        %1362 = vmatpush2.bf16.msra.mxu0 0
        %1363 = vmatprep.subr.bf16.mxu0 0
        %1364 = vmatpush2.bf16.msra.mxu0 0
        %1365 = vmatprep.subr.bf16.mxu0 0
        %1366 = vmatpush2.bf16.msra.mxu0 0
        %1367 = vmatprep.subr.bf16.mxu0 0
        %1368 = vmatpush2.bf16.msra.mxu0 0
        %1369 = vmatprep.subr.bf16.mxu0 0
        %1370 = vmatpush2.bf16.msra.mxu0 0
        %1371 = vmatprep.mubr.bf16.mxu0 0
        %1372 = vmatmul.mubr.bf16.gmra.mxu0 %v1337
        %v1373 = vpop.f32.mrf.mxu0
        %v1374 = vadd.f32 0.0, %v1373
        %v1375 = vpop.f32.mrf.mxu0
        %v1376 = vpop.f32.mrf.mxu0
        %v1377 = vadd.f32 0.0, %v1376
        %v1378 = vpop.f32.mrf.mxu0
        %1379 = vdwg.mxu0
        %v1382 = vunpack.c.l.b16 %v1215
        %v1383 = vunpack.c.l.b16 %v1216
        %v1384 = vpack.c.b16 %v1383, %v1382
        %v1386 = vsel %vm322, %v1384, 0
        %1388 = vmatprep.subr.bf16.mxu0 0
        %1389 = vmatpush1.bf16.msra.mxu0 0
        %1390 = vmatprep.subr.bf16.mxu0 0
        %1391 = vmatpush1.bf16.msra.mxu0 0
        %1392 = vmatprep.subr.bf16.mxu0 0
        %1393 = vmatpush1.bf16.msra.mxu0 0
        %1394 = vmatprep.subr.bf16.mxu0 0
        %1395 = vmatpush1.bf16.msra.mxu0 0
        %1396 = vmatprep.subr.bf16.mxu0 0
        %1397 = vmatpush1.bf16.msra.mxu0 0
        %1398 = vmatprep.subr.bf16.mxu0 0
        %1399 = vmatpush1.bf16.msra.mxu0 0
        %1400 = vmatprep.subr.bf16.mxu0 0
        %1401 = vmatpush1.bf16.msra.mxu0 0
        %1402 = vmatprep.subr.bf16.mxu0 0
        %1403 = vmatpush1.bf16.msra.mxu0 %v1228
        %1404 = vmatprep.subr.bf16.mxu0 0
        %1405 = vmatpush2.bf16.msra.mxu0 0
        %1406 = vmatprep.subr.bf16.mxu0 0
        %1407 = vmatpush2.bf16.msra.mxu0 0
        %1408 = vmatprep.subr.bf16.mxu0 0
        %1409 = vmatpush2.bf16.msra.mxu0 0
        %1410 = vmatprep.subr.bf16.mxu0 0
        %1411 = vmatpush2.bf16.msra.mxu0 0
        %1412 = vmatprep.subr.bf16.mxu0 0
        %1413 = vmatpush2.bf16.msra.mxu0 0
        %1414 = vmatprep.subr.bf16.mxu0 0
        %1415 = vmatpush2.bf16.msra.mxu0 0
        %1416 = vmatprep.subr.bf16.mxu0 0
        %1417 = vmatpush2.bf16.msra.mxu0 0
        %1418 = vmatprep.subr.bf16.mxu0 0
        %1419 = vmatpush2.bf16.msra.mxu0 0
        %1420 = vmatprep.mubr.bf16.mxu0 0
        %1421 = vmatmul.mubr.bf16.gmra.mxu0 %v1386
        %v1422 = vpop.f32.mrf.mxu0
        %v1423 = vadd.f32 0.0, %v1422
        %v1424 = vpop.f32.mrf.mxu0
        %v1425 = vpop.f32.mrf.mxu0
        %v1426 = vadd.f32 0.0, %v1425
        %v1427 = vpop.f32.mrf.mxu0
        %1428 = vdwg.mxu0
        %v1431 = vunpack.c.l.b16 %v1217
        %v1432 = vunpack.c.l.b16 %v1218
        %v1433 = vpack.c.b16 %v1432, %v1431
        %v1435 = vsel %vm322, %v1433, 0
        %1437 = vmatprep.subr.bf16.mxu0 0
        %1438 = vmatpush1.bf16.msra.mxu0 0
        %1439 = vmatprep.subr.bf16.mxu0 0
        %1440 = vmatpush1.bf16.msra.mxu0 0
        %1441 = vmatprep.subr.bf16.mxu0 0
        %1442 = vmatpush1.bf16.msra.mxu0 0
        %1443 = vmatprep.subr.bf16.mxu0 0
        %1444 = vmatpush1.bf16.msra.mxu0 0
        %1445 = vmatprep.subr.bf16.mxu0 0
        %1446 = vmatpush1.bf16.msra.mxu0 0
        %1447 = vmatprep.subr.bf16.mxu0 0
        %1448 = vmatpush1.bf16.msra.mxu0 0
        %1449 = vmatprep.subr.bf16.mxu0 0
        %1450 = vmatpush1.bf16.msra.mxu0 0
        %1451 = vmatprep.subr.bf16.mxu0 0
        %1452 = vmatpush1.bf16.msra.mxu0 %v1229
        %1453 = vmatprep.subr.bf16.mxu0 0
        %1454 = vmatpush2.bf16.msra.mxu0 0
        %1455 = vmatprep.subr.bf16.mxu0 0
        %1456 = vmatpush2.bf16.msra.mxu0 0
        %1457 = vmatprep.subr.bf16.mxu0 0
        %1458 = vmatpush2.bf16.msra.mxu0 0
        %1459 = vmatprep.subr.bf16.mxu0 0
        %1460 = vmatpush2.bf16.msra.mxu0 0
        %1461 = vmatprep.subr.bf16.mxu0 0
        %1462 = vmatpush2.bf16.msra.mxu0 0
        %1463 = vmatprep.subr.bf16.mxu0 0
        %1464 = vmatpush2.bf16.msra.mxu0 0
        %1465 = vmatprep.subr.bf16.mxu0 0
        %1466 = vmatpush2.bf16.msra.mxu0 0
        %1467 = vmatprep.subr.bf16.mxu0 0
        %1468 = vmatpush2.bf16.msra.mxu0 0
        %1469 = vmatprep.mubr.bf16.mxu0 0
        %1470 = vmatmul.mubr.bf16.gmra.mxu0 %v1435
        %v1471 = vpop.f32.mrf.mxu0
        %v1472 = vadd.f32 0.0, %v1471
        %v1473 = vpop.f32.mrf.mxu0
        %v1474 = vpop.f32.mrf.mxu0
        %v1475 = vadd.f32 0.0, %v1474
        %v1476 = vpop.f32.mrf.mxu0
        %1477 = vdwg.mxu0
        %v1480 = vunpack.c.l.b16 %v1219
        %v1481 = vunpack.c.l.b16 %v1220
        %v1482 = vpack.c.b16 %v1481, %v1480
        %v1484 = vsel %vm322, %v1482, 0
        %1486 = vmatprep.subr.bf16.mxu0 0
        %1487 = vmatpush1.bf16.msra.mxu0 0
        %1488 = vmatprep.subr.bf16.mxu0 0
        %1489 = vmatpush1.bf16.msra.mxu0 0
        %1490 = vmatprep.subr.bf16.mxu0 0
        %1491 = vmatpush1.bf16.msra.mxu0 0
        %1492 = vmatprep.subr.bf16.mxu0 0
        %1493 = vmatpush1.bf16.msra.mxu0 0
        %1494 = vmatprep.subr.bf16.mxu0 0
        %1495 = vmatpush1.bf16.msra.mxu0 0
        %1496 = vmatprep.subr.bf16.mxu0 0
        %1497 = vmatpush1.bf16.msra.mxu0 0
        %1498 = vmatprep.subr.bf16.mxu0 0
        %1499 = vmatpush1.bf16.msra.mxu0 0
        %1500 = vmatprep.subr.bf16.mxu0 0
        %1501 = vmatpush1.bf16.msra.mxu0 %v1230
        %1502 = vmatprep.subr.bf16.mxu0 0
        %1503 = vmatpush2.bf16.msra.mxu0 0
        %1504 = vmatprep.subr.bf16.mxu0 0
        %1505 = vmatpush2.bf16.msra.mxu0 0
        %1506 = vmatprep.subr.bf16.mxu0 0
        %1507 = vmatpush2.bf16.msra.mxu0 0
        %1508 = vmatprep.subr.bf16.mxu0 0
        %1509 = vmatpush2.bf16.msra.mxu0 0
        %1510 = vmatprep.subr.bf16.mxu0 0
        %1511 = vmatpush2.bf16.msra.mxu0 0
        %1512 = vmatprep.subr.bf16.mxu0 0
        %1513 = vmatpush2.bf16.msra.mxu0 0
        %1514 = vmatprep.subr.bf16.mxu0 0
        %1515 = vmatpush2.bf16.msra.mxu0 0
        %1516 = vmatprep.subr.bf16.mxu0 0
        %1517 = vmatpush2.bf16.msra.mxu0 0
        %1518 = vmatprep.mubr.bf16.mxu0 0
        %1519 = vmatmul.mubr.bf16.gmra.mxu0 %v1484
        %v1520 = vpop.f32.mrf.mxu0
        %v1521 = vadd.f32 0.0, %v1520
        %v1522 = vpop.f32.mrf.mxu0
        %v1523 = vpop.f32.mrf.mxu0
        %v1524 = vadd.f32 0.0, %v1523
        %v1525 = vpop.f32.mrf.mxu0
        %1526 = vdwg.mxu0
        %v1529 = vunpack.c.l.b16 %v1221
        %v1530 = vunpack.c.l.b16 %v1222
        %v1531 = vpack.c.b16 %v1530, %v1529
        %v1533 = vsel %vm322, %v1531, 0
        %1535 = vmatprep.subr.bf16.mxu0 0
        %1536 = vmatpush1.bf16.msra.mxu0 0
        %1537 = vmatprep.subr.bf16.mxu0 0
        %1538 = vmatpush1.bf16.msra.mxu0 0
        %1539 = vmatprep.subr.bf16.mxu0 0
        %1540 = vmatpush1.bf16.msra.mxu0 0
        %1541 = vmatprep.subr.bf16.mxu0 0
        %1542 = vmatpush1.bf16.msra.mxu0 0
        %1543 = vmatprep.subr.bf16.mxu0 0
        %1544 = vmatpush1.bf16.msra.mxu0 0
        %1545 = vmatprep.subr.bf16.mxu0 0
        %1546 = vmatpush1.bf16.msra.mxu0 0
        %1547 = vmatprep.subr.bf16.mxu0 0
        %1548 = vmatpush1.bf16.msra.mxu0 0
        %1549 = vmatprep.subr.bf16.mxu0 0
        %1550 = vmatpush1.bf16.msra.mxu0 %v1231
        %1551 = vmatprep.subr.bf16.mxu0 0
        %1552 = vmatpush2.bf16.msra.mxu0 0
        %1553 = vmatprep.subr.bf16.mxu0 0
        %1554 = vmatpush2.bf16.msra.mxu0 0
        %1555 = vmatprep.subr.bf16.mxu0 0
        %1556 = vmatpush2.bf16.msra.mxu0 0
        %1557 = vmatprep.subr.bf16.mxu0 0
        %1558 = vmatpush2.bf16.msra.mxu0 0
        %1559 = vmatprep.subr.bf16.mxu0 0
        %1560 = vmatpush2.bf16.msra.mxu0 0
        %1561 = vmatprep.subr.bf16.mxu0 0
        %1562 = vmatpush2.bf16.msra.mxu0 0
        %1563 = vmatprep.subr.bf16.mxu0 0
        %1564 = vmatpush2.bf16.msra.mxu0 0
        %1565 = vmatprep.subr.bf16.mxu0 0
        %1566 = vmatpush2.bf16.msra.mxu0 0
        %1567 = vmatprep.mubr.bf16.mxu0 0
        %1568 = vmatmul.mubr.bf16.gmra.mxu0 %v1533
        %v1569 = vpop.f32.mrf.mxu0
        %v1570 = vadd.f32 0.0, %v1569
        %v1571 = vpop.f32.mrf.mxu0
        %v1572 = vpop.f32.mrf.mxu0
        %v1573 = vadd.f32 0.0, %v1572
        %v1574 = vpop.f32.mrf.mxu0
        %1575 = vdwg.mxu0
        %v1578 = vunpack.c.l.b16 %v1223
        %v1579 = vunpack.c.l.b16 %v1224
        %v1580 = vpack.c.b16 %v1579, %v1578
        %v1582 = vsel %vm322, %v1580, 0
        %1584 = vmatprep.subr.bf16.mxu0 0
        %1585 = vmatpush1.bf16.msra.mxu0 0
        %1586 = vmatprep.subr.bf16.mxu0 0
        %1587 = vmatpush1.bf16.msra.mxu0 0
        %1588 = vmatprep.subr.bf16.mxu0 0
        %1589 = vmatpush1.bf16.msra.mxu0 0
        %1590 = vmatprep.subr.bf16.mxu0 0
        %1591 = vmatpush1.bf16.msra.mxu0 0
        %1592 = vmatprep.subr.bf16.mxu0 0
        %1593 = vmatpush1.bf16.msra.mxu0 0
        %1594 = vmatprep.subr.bf16.mxu0 0
        %1595 = vmatpush1.bf16.msra.mxu0 0
        %1596 = vmatprep.subr.bf16.mxu0 0
        %1597 = vmatpush1.bf16.msra.mxu0 0
        %1598 = vmatprep.subr.bf16.mxu0 0
        %1599 = vmatpush1.bf16.msra.mxu0 %v1232
        %1600 = vmatprep.subr.bf16.mxu0 0
        %1601 = vmatpush2.bf16.msra.mxu0 0
        %1602 = vmatprep.subr.bf16.mxu0 0
        %1603 = vmatpush2.bf16.msra.mxu0 0
        %1604 = vmatprep.subr.bf16.mxu0 0
        %1605 = vmatpush2.bf16.msra.mxu0 0
        %1606 = vmatprep.subr.bf16.mxu0 0
        %1607 = vmatpush2.bf16.msra.mxu0 0
        %1608 = vmatprep.subr.bf16.mxu0 0
        %1609 = vmatpush2.bf16.msra.mxu0 0
        %1610 = vmatprep.subr.bf16.mxu0 0
        %1611 = vmatpush2.bf16.msra.mxu0 0
        %1612 = vmatprep.subr.bf16.mxu0 0
        %1613 = vmatpush2.bf16.msra.mxu0 0
        %1614 = vmatprep.subr.bf16.mxu0 0
        %1615 = vmatpush2.bf16.msra.mxu0 0
        %1616 = vmatprep.mubr.bf16.mxu0 0
        %1617 = vmatmul.mubr.bf16.gmra.mxu0 %v1582
        %v1618 = vpop.f32.mrf.mxu0
        %v1619 = vadd.f32 0.0, %v1618
        %v1620 = vpop.f32.mrf.mxu0
        %v1621 = vpop.f32.mrf.mxu0
        %v1622 = vadd.f32 0.0, %v1621
        %v1623 = vpop.f32.mrf.mxu0
        %1624 = vdwg.mxu0
        %v1625 = vmul.f32 %v1276, %v1073
        %v1626 = vmul.f32 %v1279, %v1074
        %v1627 = vmul.f32 %v1325, %v1075
        %v1628 = vmul.f32 %v1328, %v1076
        %v1629 = vmul.f32 %v1374, %v1077
        %v1630 = vmul.f32 %v1377, %v1078
        %v1631 = vmul.f32 %v1423, %v1079
        %v1632 = vmul.f32 %v1426, %v1080
        %v1633 = vmul.f32 %v1472, %v1081
        %v1634 = vmul.f32 %v1475, %v1082
        %v1635 = vmul.f32 %v1521, %v1083
        %v1636 = vmul.f32 %v1524, %v1084
        %v1637 = vmul.f32 %v1570, %v1085
        %v1638 = vmul.f32 %v1573, %v1086
        %v1639 = vmul.f32 %v1619, %v1087
        %v1640 = vmul.f32 %v1622, %v1088
        %v1641 = vld [vmem:[%s1] sm:$0x1]
        %1643 = vset.pattern.permute.xlu0 0
        %1644 = vperm.xlu0 %1643, %v1625
        %v1645 = vpop.permute.xlu0 %1644
        %1648 = vset.pattern.permute.xlu0 0
        %1649 = vperm.xlu0 %1648, %v1626
        %v1650 = vpop.permute.xlu0 %1649
        %1653 = vset.pattern.permute.xlu0 0
        %1654 = vperm.xlu0 %1653, %v1627
        %v1655 = vpop.permute.xlu0 %1654
        %1658 = vset.pattern.permute.xlu0 0
        %1659 = vperm.xlu0 %1658, %v1628
        %v1660 = vpop.permute.xlu0 %1659
        %1663 = vset.pattern.permute.xlu0 0
        %1664 = vperm.xlu0 %1663, %v1629
        %v1665 = vpop.permute.xlu0 %1664
        %1668 = vset.pattern.permute.xlu0 0
        %1669 = vperm.xlu0 %1668, %v1630
        %v1670 = vpop.permute.xlu0 %1669
        %1673 = vset.pattern.permute.xlu0 0
        %1674 = vperm.xlu0 %1673, %v1631
        %v1675 = vpop.permute.xlu0 %1674
        %1678 = vset.pattern.permute.xlu0 0
        %1679 = vperm.xlu0 %1678, %v1632
        %v1680 = vpop.permute.xlu0 %1679
        %1683 = vset.pattern.permute.xlu0 0
        %1684 = vperm.xlu0 %1683, %v1633
        %v1685 = vpop.permute.xlu0 %1684
        %1688 = vset.pattern.permute.xlu0 0
        %1689 = vperm.xlu0 %1688, %v1634
        %v1690 = vpop.permute.xlu0 %1689
        %1693 = vset.pattern.permute.xlu0 0
        %1694 = vperm.xlu0 %1693, %v1635
        %v1695 = vpop.permute.xlu0 %1694
        %1698 = vset.pattern.permute.xlu0 0
        %1699 = vperm.xlu0 %1698, %v1636
        %v1700 = vpop.permute.xlu0 %1699
        %1703 = vset.pattern.permute.xlu0 0
        %1704 = vperm.xlu0 %1703, %v1637
        %v1705 = vpop.permute.xlu0 %1704
        %1708 = vset.pattern.permute.xlu0 0
        %1709 = vperm.xlu0 %1708, %v1638
        %v1710 = vpop.permute.xlu0 %1709
        %1713 = vset.pattern.permute.xlu0 0
        %1714 = vperm.xlu0 %1713, %v1639
        %v1715 = vpop.permute.xlu0 %1714
        %1718 = vset.pattern.permute.xlu0 0
        %1719 = vperm.xlu0 %1718, %v1640
        %v1720 = vpop.permute.xlu0 %1719
        %v1723 = vlaneseq
        %v1724 = vshrl.u32 %v1723, 7
        %v1725 = vsub.s32 0, %v1724
        %v1726 = vrot.slane %v1641, %v1725
        %v1728 = vmul.f32 %v1645, %v1726
        %v1729 = vmul.f32 %v1650, %v1726
        %v1730 = vmul.f32 %v1655, %v1726
        %v1731 = vmul.f32 %v1660, %v1726
        %v1732 = vmul.f32 %v1665, %v1726
        %v1733 = vmul.f32 %v1670, %v1726
        %v1734 = vmul.f32 %v1675, %v1726
        %v1735 = vmul.f32 %v1680, %v1726
        %v1736 = vmul.f32 %v1685, %v1726
        %v1737 = vmul.f32 %v1690, %v1726
        %v1738 = vmul.f32 %v1695, %v1726
        %v1739 = vmul.f32 %v1700, %v1726
        %v1740 = vmul.f32 %v1705, %v1726
        %v1741 = vmul.f32 %v1710, %v1726
        %v1742 = vmul.f32 %v1715, %v1726
        %v1743 = vmul.f32 %v1720, %v1726
        %v1744 = vld [vmem:[%s2] sm:$0x1]
        %v1746 = vlaneseq
        %v1747 = vshrl.u32 %v1746, 7
        %v1748 = vsub.s32 0, %v1747
        %v1749 = vrot.slane %v1744, %v1748
        %v1751 = vadd.f32 %v1728, %v1749
        %v1752 = vadd.f32 %v1729, %v1749
        %v1753 = vadd.f32 %v1730, %v1749
        %v1754 = vadd.f32 %v1731, %v1749
        %v1755 = vadd.f32 %v1732, %v1749
        %v1756 = vadd.f32 %v1733, %v1749
        %v1757 = vadd.f32 %v1734, %v1749
        %v1758 = vadd.f32 %v1735, %v1749
        %v1759 = vadd.f32 %v1736, %v1749
        %v1760 = vadd.f32 %v1737, %v1749
        %v1761 = vadd.f32 %v1738, %v1749
        %v1762 = vadd.f32 %v1739, %v1749
        %v1763 = vadd.f32 %v1740, %v1749
        %v1764 = vadd.f32 %v1741, %v1749
        %v1765 = vadd.f32 %v1742, %v1749
        %v1766 = vadd.f32 %v1743, %v1749
        %v1767 = vmax.f32 %v1751, 0.0
        %v1768 = vmax.f32 %v1752, 0.0
        %v1769 = vmax.f32 %v1753, 0.0
        %v1770 = vmax.f32 %v1754, 0.0
        %v1771 = vmax.f32 %v1755, 0.0
        %v1772 = vmax.f32 %v1756, 0.0
        %v1773 = vmax.f32 %v1757, 0.0
        %v1774 = vmax.f32 %v1758, 0.0
        %v1775 = vmax.f32 %v1759, 0.0
        %v1776 = vmax.f32 %v1760, 0.0
        %v1777 = vmax.f32 %v1761, 0.0
        %v1778 = vmax.f32 %v1762, 0.0
        %v1779 = vmax.f32 %v1763, 0.0
        %v1780 = vmax.f32 %v1764, 0.0
        %v1781 = vmax.f32 %v1765, 0.0
        %v1782 = vmax.f32 %v1766, 0.0
        %v1783 = vld [vmem:[%s3] sm:$0xff]
        %v1784 = vld [vmem:[%s3 + $0x8] sm:$0xff]
        %v1785 = vld [vmem:[%s3 + $0x10] sm:$0xff]
        %v1786 = vld [vmem:[%s3 + $0x18] sm:$0xff]
        %vm1787 = vcmask 261120
        %v1789 = vsel %vm1787, %v1767, 0
        %v1792 = vsel %vm1787, %v1768, 0
        %v1795 = vsel %vm1787, %v1769, 0
        %v1798 = vsel %vm1787, %v1770, 0
        %v1801 = vsel %vm1787, %v1771, 0
        %v1804 = vsel %vm1787, %v1772, 0
        %v1807 = vsel %vm1787, %v1773, 0
        %v1810 = vsel %vm1787, %v1774, 0
        %v1813 = vsel %vm1787, %v1775, 0
        %v1816 = vsel %vm1787, %v1776, 0
        %v1819 = vsel %vm1787, %v1777, 0
        %v1822 = vsel %vm1787, %v1778, 0
        %v1825 = vsel %vm1787, %v1779, 0
        %v1828 = vsel %vm1787, %v1780, 0
        %v1831 = vsel %vm1787, %v1781, 0
        %v1834 = vsel %vm1787, %v1782, 0
        %1836 = vmatprep.subr.mxu0 0.0
        %1837 = vmatpush1.msra.mxu0 0.0
        %1838 = vmatprep.subr.mxu0 0.0
        %1839 = vmatpush1.msra.mxu0 0.0
        %1840 = vmatprep.subr.mxu0 0.0
        %1841 = vmatpush1.msra.mxu0 0.0
        %1842 = vmatprep.subr.mxu0 0.0
        %1843 = vmatpush1.msra.mxu0 0.0
        %1844 = vmatprep.subr.mxu0 0.0
        %1845 = vmatpush1.msra.mxu0 0.0
        %1846 = vmatprep.subr.mxu0 0.0
        %1847 = vmatpush1.msra.mxu0 0.0
        %1848 = vmatprep.subr.mxu0 0.0
        %1849 = vmatpush1.msra.mxu0 0.0
        %1850 = vmatprep.subr.mxu0 0.0
        %1851 = vmatpush1.msra.mxu0 0.0
        %1852 = vmatprep.subr.mxu0 0.0
        %1853 = vmatpush1.msra.mxu0 0.0
        %1854 = vmatprep.subr.mxu0 0.0
        %1855 = vmatpush1.msra.mxu0 0.0
        %1856 = vmatprep.subr.mxu0 0.0
        %1857 = vmatpush1.msra.mxu0 0.0
        %1858 = vmatprep.subr.mxu0 0.0
        %1859 = vmatpush1.msra.mxu0 0.0
        %1860 = vmatprep.subr.mxu0 0.0
        %1861 = vmatpush1.msra.mxu0 %v1786
        %1862 = vmatprep.subr.mxu0 0.0
        %1863 = vmatpush1.msra.mxu0 %v1785
        %1864 = vmatprep.subr.mxu0 0.0
        %1865 = vmatpush1.msra.mxu0 %v1784
        %1866 = vmatprep.subr.mxu0 0.0
        %1867 = vmatpush1.msra.mxu0 %v1783
        %1868 = vmatprep.subr.mxu0 0.0
        %1869 = vmatpush2.msra.mxu0 0.0
        %1870 = vmatprep.subr.mxu0 0.0
        %1871 = vmatpush2.msra.mxu0 0.0
        %1872 = vmatprep.subr.mxu0 0.0
        %1873 = vmatpush2.msra.mxu0 0.0
        %1874 = vmatprep.subr.mxu0 0.0
        %1875 = vmatpush2.msra.mxu0 0.0
        %1876 = vmatprep.subr.mxu0 0.0
        %1877 = vmatpush2.msra.mxu0 0.0
        %1878 = vmatprep.subr.mxu0 0.0
        %1879 = vmatpush2.msra.mxu0 0.0
        %1880 = vmatprep.subr.mxu0 0.0
        %1881 = vmatpush2.msra.mxu0 0.0
        %1882 = vmatprep.subr.mxu0 0.0
        %1883 = vmatpush2.msra.mxu0 0.0
        %1884 = vmatprep.subr.mxu0 0.0
        %1885 = vmatpush2.msra.mxu0 0.0
        %1886 = vmatprep.subr.mxu0 0.0
        %1887 = vmatpush2.msra.mxu0 0.0
        %1888 = vmatprep.subr.mxu0 0.0
        %1889 = vmatpush2.msra.mxu0 0.0
        %1890 = vmatprep.subr.mxu0 0.0
        %1891 = vmatpush2.msra.mxu0 0.0
        %1892 = vmatprep.subr.mxu0 0.0
        %1893 = vmatpush2.msra.mxu0 0.0
        %1894 = vmatprep.subr.mxu0 0.0
        %1895 = vmatpush2.msra.mxu0 0.0
        %1896 = vmatprep.subr.mxu0 0.0
        %1897 = vmatpush2.msra.mxu0 0.0
        %1898 = vmatprep.subr.mxu0 0.0
        %1899 = vmatpush2.msra.mxu0 0.0
        %1900 = vmatprep.mubr.f32.mxu0 0.0
        %1901 = vmatmul.mubr.f32.gmra.mxu0 %v1789
        %v1902 = vpop.f32.mrf.mxu0
        %v1903 = vadd.f32 0.0, %v1902
        %v1904 = vpop.f32.mrf.mxu0
        %1905 = vmatprep.mubr.f32.mxu0 0.0
        %1906 = vmatmul.mubr.f32.gmra.mxu0 %v1792
        %v1907 = vpop.f32.mrf.mxu0
        %v1908 = vadd.f32 0.0, %v1907
        %v1909 = vpop.f32.mrf.mxu0
        %1910 = vmatprep.mubr.f32.mxu0 0.0
        %1911 = vmatmul.mubr.f32.gmra.mxu0 %v1795
        %v1912 = vpop.f32.mrf.mxu0
        %v1913 = vadd.f32 0.0, %v1912
        %v1914 = vpop.f32.mrf.mxu0
        %1915 = vmatprep.mubr.f32.mxu0 0.0
        %1916 = vmatmul.mubr.f32.gmra.mxu0 %v1798
        %v1917 = vpop.f32.mrf.mxu0
        %v1918 = vadd.f32 0.0, %v1917
        %v1919 = vpop.f32.mrf.mxu0
        %1920 = vmatprep.mubr.f32.mxu0 0.0
        %1921 = vmatmul.mubr.f32.gmra.mxu0 %v1801
        %v1922 = vpop.f32.mrf.mxu0
        %v1923 = vadd.f32 0.0, %v1922
        %v1924 = vpop.f32.mrf.mxu0
        %1925 = vmatprep.mubr.f32.mxu0 0.0
        %1926 = vmatmul.mubr.f32.gmra.mxu0 %v1804
        %v1927 = vpop.f32.mrf.mxu0
        %v1928 = vadd.f32 0.0, %v1927
        %v1929 = vpop.f32.mrf.mxu0
        %1930 = vmatprep.mubr.f32.mxu0 0.0
        %1931 = vmatmul.mubr.f32.gmra.mxu0 %v1807
        %v1932 = vpop.f32.mrf.mxu0
        %v1933 = vadd.f32 0.0, %v1932
        %v1934 = vpop.f32.mrf.mxu0
        %1935 = vmatprep.mubr.f32.mxu0 0.0
        %1936 = vmatmul.mubr.f32.gmra.mxu0 %v1810
        %v1937 = vpop.f32.mrf.mxu0
        %v1938 = vadd.f32 0.0, %v1937
        %v1939 = vpop.f32.mrf.mxu0
        %1940 = vmatprep.mubr.f32.mxu0 0.0
        %1941 = vmatmul.mubr.f32.gmra.mxu0 %v1813
        %v1942 = vpop.f32.mrf.mxu0
        %v1943 = vadd.f32 0.0, %v1942
        %v1944 = vpop.f32.mrf.mxu0
        %1945 = vmatprep.mubr.f32.mxu0 0.0
        %1946 = vmatmul.mubr.f32.gmra.mxu0 %v1816
        %v1947 = vpop.f32.mrf.mxu0
        %v1948 = vadd.f32 0.0, %v1947
        %v1949 = vpop.f32.mrf.mxu0
        %1950 = vmatprep.mubr.f32.mxu0 0.0
        %1951 = vmatmul.mubr.f32.gmra.mxu0 %v1819
        %v1952 = vpop.f32.mrf.mxu0
        %v1953 = vadd.f32 0.0, %v1952
        %v1954 = vpop.f32.mrf.mxu0
        %1955 = vmatprep.mubr.f32.mxu0 0.0
        %1956 = vmatmul.mubr.f32.gmra.mxu0 %v1822
        %v1957 = vpop.f32.mrf.mxu0
        %v1958 = vadd.f32 0.0, %v1957
        %v1959 = vpop.f32.mrf.mxu0
        %1960 = vmatprep.mubr.f32.mxu0 0.0
        %1961 = vmatmul.mubr.f32.gmra.mxu0 %v1825
        %v1962 = vpop.f32.mrf.mxu0
        %v1963 = vadd.f32 0.0, %v1962
        %v1964 = vpop.f32.mrf.mxu0
        %1965 = vmatprep.mubr.f32.mxu0 0.0
        %1966 = vmatmul.mubr.f32.gmra.mxu0 %v1828
        %v1967 = vpop.f32.mrf.mxu0
        %v1968 = vadd.f32 0.0, %v1967
        %v1969 = vpop.f32.mrf.mxu0
        %1970 = vmatprep.mubr.f32.mxu0 0.0
        %1971 = vmatmul.mubr.f32.gmra.mxu0 %v1831
        %v1972 = vpop.f32.mrf.mxu0
        %v1973 = vadd.f32 0.0, %v1972
        %v1974 = vpop.f32.mrf.mxu0
        %1975 = vmatprep.mubr.f32.mxu0 0.0
        %1976 = vmatmul.mubr.f32.gmra.mxu0 %v1834
        %v1977 = vpop.f32.mrf.mxu0
        %v1978 = vadd.f32 0.0, %v1977
        %v1979 = vpop.f32.mrf.mxu0
        %1980 = vdwg.mxu0
        %v1981 = vpack.c.bf16 %v1908, %v1903
        %v1982 = vpack.c.bf16 %v1918, %v1913
        %v1983 = vpack.c.bf16 %v1928, %v1923
        %v1984 = vpack.c.bf16 %v1938, %v1933
        %v1985 = vpack.c.bf16 %v1948, %v1943
        %v1986 = vpack.c.bf16 %v1958, %v1953
        %v1987 = vpack.c.bf16 %v1968, %v1963
        %v1988 = vpack.c.bf16 %v1978, %v1973
        %1989 = vmatprep.subr.bf16.mxu0 0
        %1990 = vmatpush1.bf16.msra.mxu0 0
        %1991 = vmatprep.subr.bf16.mxu0 0
        %1992 = vmatpush1.bf16.msra.mxu0 0
        %1993 = vmatprep.subr.bf16.mxu0 0
        %1994 = vmatpush1.bf16.msra.mxu0 0
        %1995 = vmatprep.subr.bf16.mxu0 0
        %1996 = vmatpush1.bf16.msra.mxu0 0
        %1997 = vmatprep.subr.bf16.mxu0 0
        %1998 = vmatpush1.bf16.msra.mxu0 0
        %1999 = vmatprep.subr.bf16.mxu0 0
        %2000 = vmatpush1.bf16.msra.mxu0 0
        %2001 = vmatprep.subr.bf16.mxu0 0
        %2002 = vmatpush1.bf16.msra.mxu0 0
        %2003 = vmatprep.subr.bf16.mxu0 0
        %2004 = vmatpush1.bf16.msra.mxu0 %v1981
        %2005 = vmatprep.subr.bf16.mxu0 0
        %2006 = vmatpush2.bf16.msra.mxu0 0
        %2007 = vmatprep.subr.bf16.mxu0 0
        %2008 = vmatpush2.bf16.msra.mxu0 0
        %2009 = vmatprep.subr.bf16.mxu0 0
        %2010 = vmatpush2.bf16.msra.mxu0 0
        %2011 = vmatprep.subr.bf16.mxu0 0
        %2012 = vmatpush2.bf16.msra.mxu0 0
        %2013 = vmatprep.subr.bf16.mxu0 0
        %2014 = vmatpush2.bf16.msra.mxu0 0
        %2015 = vmatprep.subr.bf16.mxu0 0
        %2016 = vmatpush2.bf16.msra.mxu0 0
        %2017 = vmatprep.subr.bf16.mxu0 0
        %2018 = vmatpush2.bf16.msra.mxu0 0
        %2019 = vmatprep.subr.bf16.mxu0 0
        %2020 = vmatpush2.bf16.msra.mxu0 0
        %2021 = vmatprep.mubr.bf16.mxu0 0
        %2022 = vmatmul.mubr.bf16.gmra.mxu0 %v1239
        %v2023 = vpop.f32.mrf.mxu0
        %v2024 = vadd.f32 0.0, %v2023
        %v2025 = vpop.f32.mrf.mxu0
        %v2026 = vpop.f32.mrf.mxu0
        %v2027 = vadd.f32 0.0, %v2026
        %v2028 = vpop.f32.mrf.mxu0
        %2029 = vdwg.mxu0
        %2030 = vmatprep.subr.bf16.mxu0 0
        %2031 = vmatpush1.bf16.msra.mxu0 0
        %2032 = vmatprep.subr.bf16.mxu0 0
        %2033 = vmatpush1.bf16.msra.mxu0 0
        %2034 = vmatprep.subr.bf16.mxu0 0
        %2035 = vmatpush1.bf16.msra.mxu0 0
        %2036 = vmatprep.subr.bf16.mxu0 0
        %2037 = vmatpush1.bf16.msra.mxu0 0
        %2038 = vmatprep.subr.bf16.mxu0 0
        %2039 = vmatpush1.bf16.msra.mxu0 0
        %2040 = vmatprep.subr.bf16.mxu0 0
        %2041 = vmatpush1.bf16.msra.mxu0 0
        %2042 = vmatprep.subr.bf16.mxu0 0
        %2043 = vmatpush1.bf16.msra.mxu0 0
        %2044 = vmatprep.subr.bf16.mxu0 0
        %2045 = vmatpush1.bf16.msra.mxu0 %v1982
        %2046 = vmatprep.subr.bf16.mxu0 0
        %2047 = vmatpush2.bf16.msra.mxu0 0
        %2048 = vmatprep.subr.bf16.mxu0 0
        %2049 = vmatpush2.bf16.msra.mxu0 0
        %2050 = vmatprep.subr.bf16.mxu0 0
        %2051 = vmatpush2.bf16.msra.mxu0 0
        %2052 = vmatprep.subr.bf16.mxu0 0
        %2053 = vmatpush2.bf16.msra.mxu0 0
        %2054 = vmatprep.subr.bf16.mxu0 0
        %2055 = vmatpush2.bf16.msra.mxu0 0
        %2056 = vmatprep.subr.bf16.mxu0 0
        %2057 = vmatpush2.bf16.msra.mxu0 0
        %2058 = vmatprep.subr.bf16.mxu0 0
        %2059 = vmatpush2.bf16.msra.mxu0 0
        %2060 = vmatprep.subr.bf16.mxu0 0
        %2061 = vmatpush2.bf16.msra.mxu0 0
        %2062 = vmatprep.mubr.bf16.mxu0 0
        %2063 = vmatmul.mubr.bf16.gmra.mxu0 %v1288
        %v2064 = vpop.f32.mrf.mxu0
        %v2065 = vadd.f32 0.0, %v2064
        %v2066 = vpop.f32.mrf.mxu0
        %v2067 = vpop.f32.mrf.mxu0
        %v2068 = vadd.f32 0.0, %v2067
        %v2069 = vpop.f32.mrf.mxu0
        %2070 = vdwg.mxu0
        %2071 = vmatprep.subr.bf16.mxu0 0
        %2072 = vmatpush1.bf16.msra.mxu0 0
        %2073 = vmatprep.subr.bf16.mxu0 0
        %2074 = vmatpush1.bf16.msra.mxu0 0
        %2075 = vmatprep.subr.bf16.mxu0 0
        %2076 = vmatpush1.bf16.msra.mxu0 0
        %2077 = vmatprep.subr.bf16.mxu0 0
        %2078 = vmatpush1.bf16.msra.mxu0 0
        %2079 = vmatprep.subr.bf16.mxu0 0
        %2080 = vmatpush1.bf16.msra.mxu0 0
        %2081 = vmatprep.subr.bf16.mxu0 0
        %2082 = vmatpush1.bf16.msra.mxu0 0
        %2083 = vmatprep.subr.bf16.mxu0 0
        %2084 = vmatpush1.bf16.msra.mxu0 0
        %2085 = vmatprep.subr.bf16.mxu0 0
        %2086 = vmatpush1.bf16.msra.mxu0 %v1983
        %2087 = vmatprep.subr.bf16.mxu0 0
        %2088 = vmatpush2.bf16.msra.mxu0 0
        %2089 = vmatprep.subr.bf16.mxu0 0
        %2090 = vmatpush2.bf16.msra.mxu0 0
        %2091 = vmatprep.subr.bf16.mxu0 0
        %2092 = vmatpush2.bf16.msra.mxu0 0
        %2093 = vmatprep.subr.bf16.mxu0 0
        %2094 = vmatpush2.bf16.msra.mxu0 0
        %2095 = vmatprep.subr.bf16.mxu0 0
        %2096 = vmatpush2.bf16.msra.mxu0 0
        %2097 = vmatprep.subr.bf16.mxu0 0
        %2098 = vmatpush2.bf16.msra.mxu0 0
        %2099 = vmatprep.subr.bf16.mxu0 0
        %2100 = vmatpush2.bf16.msra.mxu0 0
        %2101 = vmatprep.subr.bf16.mxu0 0
        %2102 = vmatpush2.bf16.msra.mxu0 0
        %2103 = vmatprep.mubr.bf16.mxu0 0
        %2104 = vmatmul.mubr.bf16.gmra.mxu0 %v1337
        %v2105 = vpop.f32.mrf.mxu0
        %v2106 = vadd.f32 0.0, %v2105
        %v2107 = vpop.f32.mrf.mxu0
        %v2108 = vpop.f32.mrf.mxu0
        %v2109 = vadd.f32 0.0, %v2108
        %v2110 = vpop.f32.mrf.mxu0
        %2111 = vdwg.mxu0
        %2112 = vmatprep.subr.bf16.mxu0 0
        %2113 = vmatpush1.bf16.msra.mxu0 0
        %2114 = vmatprep.subr.bf16.mxu0 0
        %2115 = vmatpush1.bf16.msra.mxu0 0
        %2116 = vmatprep.subr.bf16.mxu0 0
        %2117 = vmatpush1.bf16.msra.mxu0 0
        %2118 = vmatprep.subr.bf16.mxu0 0
        %2119 = vmatpush1.bf16.msra.mxu0 0
        %2120 = vmatprep.subr.bf16.mxu0 0
        %2121 = vmatpush1.bf16.msra.mxu0 0
        %2122 = vmatprep.subr.bf16.mxu0 0
        %2123 = vmatpush1.bf16.msra.mxu0 0
        %2124 = vmatprep.subr.bf16.mxu0 0
        %2125 = vmatpush1.bf16.msra.mxu0 0
        %2126 = vmatprep.subr.bf16.mxu0 0
        %2127 = vmatpush1.bf16.msra.mxu0 %v1984
        %2128 = vmatprep.subr.bf16.mxu0 0
        %2129 = vmatpush2.bf16.msra.mxu0 0
        %2130 = vmatprep.subr.bf16.mxu0 0
        %2131 = vmatpush2.bf16.msra.mxu0 0
        %2132 = vmatprep.subr.bf16.mxu0 0
        %2133 = vmatpush2.bf16.msra.mxu0 0
        %2134 = vmatprep.subr.bf16.mxu0 0
        %2135 = vmatpush2.bf16.msra.mxu0 0
        %2136 = vmatprep.subr.bf16.mxu0 0
        %2137 = vmatpush2.bf16.msra.mxu0 0
        %2138 = vmatprep.subr.bf16.mxu0 0
        %2139 = vmatpush2.bf16.msra.mxu0 0
        %2140 = vmatprep.subr.bf16.mxu0 0
        %2141 = vmatpush2.bf16.msra.mxu0 0
        %2142 = vmatprep.subr.bf16.mxu0 0
        %2143 = vmatpush2.bf16.msra.mxu0 0
        %2144 = vmatprep.mubr.bf16.mxu0 0
        %2145 = vmatmul.mubr.bf16.gmra.mxu0 %v1386
        %v2146 = vpop.f32.mrf.mxu0
        %v2147 = vadd.f32 0.0, %v2146
        %v2148 = vpop.f32.mrf.mxu0
        %v2149 = vpop.f32.mrf.mxu0
        %v2150 = vadd.f32 0.0, %v2149
        %v2151 = vpop.f32.mrf.mxu0
        %2152 = vdwg.mxu0
        %2153 = vmatprep.subr.bf16.mxu0 0
        %2154 = vmatpush1.bf16.msra.mxu0 0
        %2155 = vmatprep.subr.bf16.mxu0 0
        %2156 = vmatpush1.bf16.msra.mxu0 0
        %2157 = vmatprep.subr.bf16.mxu0 0
        %2158 = vmatpush1.bf16.msra.mxu0 0
        %2159 = vmatprep.subr.bf16.mxu0 0
        %2160 = vmatpush1.bf16.msra.mxu0 0
        %2161 = vmatprep.subr.bf16.mxu0 0
        %2162 = vmatpush1.bf16.msra.mxu0 0
        %2163 = vmatprep.subr.bf16.mxu0 0
        %2164 = vmatpush1.bf16.msra.mxu0 0
        %2165 = vmatprep.subr.bf16.mxu0 0
        %2166 = vmatpush1.bf16.msra.mxu0 0
        %2167 = vmatprep.subr.bf16.mxu0 0
        %2168 = vmatpush1.bf16.msra.mxu0 %v1985
        %2169 = vmatprep.subr.bf16.mxu0 0
        %2170 = vmatpush2.bf16.msra.mxu0 0
        %2171 = vmatprep.subr.bf16.mxu0 0
        %2172 = vmatpush2.bf16.msra.mxu0 0
        %2173 = vmatprep.subr.bf16.mxu0 0
        %2174 = vmatpush2.bf16.msra.mxu0 0
        %2175 = vmatprep.subr.bf16.mxu0 0
        %2176 = vmatpush2.bf16.msra.mxu0 0
        %2177 = vmatprep.subr.bf16.mxu0 0
        %2178 = vmatpush2.bf16.msra.mxu0 0
        %2179 = vmatprep.subr.bf16.mxu0 0
        %2180 = vmatpush2.bf16.msra.mxu0 0
        %2181 = vmatprep.subr.bf16.mxu0 0
        %2182 = vmatpush2.bf16.msra.mxu0 0
        %2183 = vmatprep.subr.bf16.mxu0 0
        %2184 = vmatpush2.bf16.msra.mxu0 0
        %2185 = vmatprep.mubr.bf16.mxu0 0
        %2186 = vmatmul.mubr.bf16.gmra.mxu0 %v1435
        %v2187 = vpop.f32.mrf.mxu0
        %v2188 = vadd.f32 0.0, %v2187
        %v2189 = vpop.f32.mrf.mxu0
        %v2190 = vpop.f32.mrf.mxu0
        %v2191 = vadd.f32 0.0, %v2190
        %v2192 = vpop.f32.mrf.mxu0
        %2193 = vdwg.mxu0
        %2194 = vmatprep.subr.bf16.mxu0 0
        %2195 = vmatpush1.bf16.msra.mxu0 0
        %2196 = vmatprep.subr.bf16.mxu0 0
        %2197 = vmatpush1.bf16.msra.mxu0 0
        %2198 = vmatprep.subr.bf16.mxu0 0
        %2199 = vmatpush1.bf16.msra.mxu0 0
        %2200 = vmatprep.subr.bf16.mxu0 0
        %2201 = vmatpush1.bf16.msra.mxu0 0
        %2202 = vmatprep.subr.bf16.mxu0 0
        %2203 = vmatpush1.bf16.msra.mxu0 0
        %2204 = vmatprep.subr.bf16.mxu0 0
        %2205 = vmatpush1.bf16.msra.mxu0 0
        %2206 = vmatprep.subr.bf16.mxu0 0
        %2207 = vmatpush1.bf16.msra.mxu0 0
        %2208 = vmatprep.subr.bf16.mxu0 0
        %2209 = vmatpush1.bf16.msra.mxu0 %v1986
        %2210 = vmatprep.subr.bf16.mxu0 0
        %2211 = vmatpush2.bf16.msra.mxu0 0
        %2212 = vmatprep.subr.bf16.mxu0 0
        %2213 = vmatpush2.bf16.msra.mxu0 0
        %2214 = vmatprep.subr.bf16.mxu0 0
        %2215 = vmatpush2.bf16.msra.mxu0 0
        %2216 = vmatprep.subr.bf16.mxu0 0
        %2217 = vmatpush2.bf16.msra.mxu0 0
        %2218 = vmatprep.subr.bf16.mxu0 0
        %2219 = vmatpush2.bf16.msra.mxu0 0
        %2220 = vmatprep.subr.bf16.mxu0 0
        %2221 = vmatpush2.bf16.msra.mxu0 0
        %2222 = vmatprep.subr.bf16.mxu0 0
        %2223 = vmatpush2.bf16.msra.mxu0 0
        %2224 = vmatprep.subr.bf16.mxu0 0
        %2225 = vmatpush2.bf16.msra.mxu0 0
        %2226 = vmatprep.mubr.bf16.mxu0 0
        %2227 = vmatmul.mubr.bf16.gmra.mxu0 %v1484
        %v2228 = vpop.f32.mrf.mxu0
        %v2229 = vadd.f32 0.0, %v2228
        %v2230 = vpop.f32.mrf.mxu0
        %v2231 = vpop.f32.mrf.mxu0
        %v2232 = vadd.f32 0.0, %v2231
        %v2233 = vpop.f32.mrf.mxu0
        %2234 = vdwg.mxu0
        %2235 = vmatprep.subr.bf16.mxu0 0
        %2236 = vmatpush1.bf16.msra.mxu0 0
        %2237 = vmatprep.subr.bf16.mxu0 0
        %2238 = vmatpush1.bf16.msra.mxu0 0
        %2239 = vmatprep.subr.bf16.mxu0 0
        %2240 = vmatpush1.bf16.msra.mxu0 0
        %2241 = vmatprep.subr.bf16.mxu0 0
        %2242 = vmatpush1.bf16.msra.mxu0 0
        %2243 = vmatprep.subr.bf16.mxu0 0
        %2244 = vmatpush1.bf16.msra.mxu0 0
        %2245 = vmatprep.subr.bf16.mxu0 0
        %2246 = vmatpush1.bf16.msra.mxu0 0
        %2247 = vmatprep.subr.bf16.mxu0 0
        %2248 = vmatpush1.bf16.msra.mxu0 0
        %2249 = vmatprep.subr.bf16.mxu0 0
        %2250 = vmatpush1.bf16.msra.mxu0 %v1987
        %2251 = vmatprep.subr.bf16.mxu0 0
        %2252 = vmatpush2.bf16.msra.mxu0 0
        %2253 = vmatprep.subr.bf16.mxu0 0
        %2254 = vmatpush2.bf16.msra.mxu0 0
        %2255 = vmatprep.subr.bf16.mxu0 0
        %2256 = vmatpush2.bf16.msra.mxu0 0
        %2257 = vmatprep.subr.bf16.mxu0 0
        %2258 = vmatpush2.bf16.msra.mxu0 0
        %2259 = vmatprep.subr.bf16.mxu0 0
        %2260 = vmatpush2.bf16.msra.mxu0 0
        %2261 = vmatprep.subr.bf16.mxu0 0
        %2262 = vmatpush2.bf16.msra.mxu0 0
        %2263 = vmatprep.subr.bf16.mxu0 0
        %2264 = vmatpush2.bf16.msra.mxu0 0
        %2265 = vmatprep.subr.bf16.mxu0 0
        %2266 = vmatpush2.bf16.msra.mxu0 0
        %2267 = vmatprep.mubr.bf16.mxu0 0
        %2268 = vmatmul.mubr.bf16.gmra.mxu0 %v1533
        %v2269 = vpop.f32.mrf.mxu0
        %v2270 = vadd.f32 0.0, %v2269
        %v2271 = vpop.f32.mrf.mxu0
        %v2272 = vpop.f32.mrf.mxu0
        %v2273 = vadd.f32 0.0, %v2272
        %v2274 = vpop.f32.mrf.mxu0
        %2275 = vdwg.mxu0
        %2276 = vmatprep.subr.bf16.mxu0 0
        %2277 = vmatpush1.bf16.msra.mxu0 0
        %2278 = vmatprep.subr.bf16.mxu0 0
        %2279 = vmatpush1.bf16.msra.mxu0 0
        %2280 = vmatprep.subr.bf16.mxu0 0
        %2281 = vmatpush1.bf16.msra.mxu0 0
        %2282 = vmatprep.subr.bf16.mxu0 0
        %2283 = vmatpush1.bf16.msra.mxu0 0
        %2284 = vmatprep.subr.bf16.mxu0 0
        %2285 = vmatpush1.bf16.msra.mxu0 0
        %2286 = vmatprep.subr.bf16.mxu0 0
        %2287 = vmatpush1.bf16.msra.mxu0 0
        %2288 = vmatprep.subr.bf16.mxu0 0
        %2289 = vmatpush1.bf16.msra.mxu0 0
        %2290 = vmatprep.subr.bf16.mxu0 0
        %2291 = vmatpush1.bf16.msra.mxu0 %v1988
        %2292 = vmatprep.subr.bf16.mxu0 0
        %2293 = vmatpush2.bf16.msra.mxu0 0
        %2294 = vmatprep.subr.bf16.mxu0 0
        %2295 = vmatpush2.bf16.msra.mxu0 0
        %2296 = vmatprep.subr.bf16.mxu0 0
        %2297 = vmatpush2.bf16.msra.mxu0 0
        %2298 = vmatprep.subr.bf16.mxu0 0
        %2299 = vmatpush2.bf16.msra.mxu0 0
        %2300 = vmatprep.subr.bf16.mxu0 0
        %2301 = vmatpush2.bf16.msra.mxu0 0
        %2302 = vmatprep.subr.bf16.mxu0 0
        %2303 = vmatpush2.bf16.msra.mxu0 0
        %2304 = vmatprep.subr.bf16.mxu0 0
        %2305 = vmatpush2.bf16.msra.mxu0 0
        %2306 = vmatprep.subr.bf16.mxu0 0
        %2307 = vmatpush2.bf16.msra.mxu0 0
        %2308 = vmatprep.mubr.bf16.mxu0 0
        %2309 = vmatmul.mubr.bf16.gmra.mxu0 %v1582
        %v2310 = vpop.f32.mrf.mxu0
        %v2311 = vadd.f32 0.0, %v2310
        %v2312 = vpop.f32.mrf.mxu0
        %v2313 = vpop.f32.mrf.mxu0
        %v2314 = vadd.f32 0.0, %v2313
        %v2315 = vpop.f32.mrf.mxu0
        %2316 = vdwg.mxu0
        %2318 = vset.pattern.permute.xlu0 0
        %2319 = vperm.xlu0 %2318, %v1073
        %v2320 = vpop.permute.xlu0 %2319
        %2323 = vset.pattern.permute.xlu0 0
        %2324 = vperm.xlu0 %2323, %v1074
        %v2325 = vpop.permute.xlu0 %2324
        %2328 = vset.pattern.permute.xlu0 0
        %2329 = vperm.xlu0 %2328, %v1075
        %v2330 = vpop.permute.xlu0 %2329
        %2333 = vset.pattern.permute.xlu0 0
        %2334 = vperm.xlu0 %2333, %v1076
        %v2335 = vpop.permute.xlu0 %2334
        %2338 = vset.pattern.permute.xlu0 0
        %2339 = vperm.xlu0 %2338, %v1077
        %v2340 = vpop.permute.xlu0 %2339
        %2343 = vset.pattern.permute.xlu0 0
        %2344 = vperm.xlu0 %2343, %v1078
        %v2345 = vpop.permute.xlu0 %2344
        %2348 = vset.pattern.permute.xlu0 0
        %2349 = vperm.xlu0 %2348, %v1079
        %v2350 = vpop.permute.xlu0 %2349
        %2353 = vset.pattern.permute.xlu0 0
        %2354 = vperm.xlu0 %2353, %v1080
        %v2355 = vpop.permute.xlu0 %2354
        %2358 = vset.pattern.permute.xlu0 0
        %2359 = vperm.xlu0 %2358, %v1081
        %v2360 = vpop.permute.xlu0 %2359
        %2363 = vset.pattern.permute.xlu0 0
        %2364 = vperm.xlu0 %2363, %v1082
        %v2365 = vpop.permute.xlu0 %2364
        %2368 = vset.pattern.permute.xlu0 0
        %2369 = vperm.xlu0 %2368, %v1083
        %v2370 = vpop.permute.xlu0 %2369
        %2373 = vset.pattern.permute.xlu0 0
        %2374 = vperm.xlu0 %2373, %v1084
        %v2375 = vpop.permute.xlu0 %2374
        %2378 = vset.pattern.permute.xlu0 0
        %2379 = vperm.xlu0 %2378, %v1085
        %v2380 = vpop.permute.xlu0 %2379
        %2383 = vset.pattern.permute.xlu0 0
        %2384 = vperm.xlu0 %2383, %v1086
        %v2385 = vpop.permute.xlu0 %2384
        %2388 = vset.pattern.permute.xlu0 0
        %2389 = vperm.xlu0 %2388, %v1087
        %v2390 = vpop.permute.xlu0 %2389
        %2393 = vset.pattern.permute.xlu0 0
        %2394 = vperm.xlu0 %2393, %v1088
        %v2395 = vpop.permute.xlu0 %2394
        %v2397 = vmul.f32 %v2024, %v2320
        %v2398 = vmul.f32 %v2027, %v2325
        %v2399 = vmul.f32 %v2065, %v2330
        %v2400 = vmul.f32 %v2068, %v2335
        %v2401 = vmul.f32 %v2106, %v2340
        %v2402 = vmul.f32 %v2109, %v2345
        %v2403 = vmul.f32 %v2147, %v2350
        %v2404 = vmul.f32 %v2150, %v2355
        %v2405 = vmul.f32 %v2188, %v2360
        %v2406 = vmul.f32 %v2191, %v2365
        %v2407 = vmul.f32 %v2229, %v2370
        %v2408 = vmul.f32 %v2232, %v2375
        %v2409 = vmul.f32 %v2270, %v2380
        %v2410 = vmul.f32 %v2273, %v2385
        %v2411 = vmul.f32 %v2311, %v2390
        %v2412 = vmul.f32 %v2314, %v2395
        %v2413 = vld [vmem:[%s4] sm:$0x1]
        %v2415 = vlaneseq
        %v2416 = vshrl.u32 %v2415, 7
        %v2417 = vsub.s32 0, %v2416
        %v2418 = vrot.slane %v2413, %v2417
        %v2420 = vadd.f32 %v2397, %v2418
        %v2421 = vadd.f32 %v2398, %v2418
        %v2422 = vadd.f32 %v2399, %v2418
        %v2423 = vadd.f32 %v2400, %v2418
        %v2424 = vadd.f32 %v2401, %v2418
        %v2425 = vadd.f32 %v2402, %v2418
        %v2426 = vadd.f32 %v2403, %v2418
        %v2427 = vadd.f32 %v2404, %v2418
        %v2428 = vadd.f32 %v2405, %v2418
        %v2429 = vadd.f32 %v2406, %v2418
        %v2430 = vadd.f32 %v2407, %v2418
        %v2431 = vadd.f32 %v2408, %v2418
        %v2432 = vadd.f32 %v2409, %v2418
        %v2433 = vadd.f32 %v2410, %v2418
        %v2434 = vadd.f32 %v2411, %v2418
        %v2435 = vadd.f32 %v2412, %v2418
        %v2436 = vmax.f32 %v2420, 0.0
        %v2437 = vmax.f32 %v2421, 0.0
        %v2438 = vmax.f32 %v2422, 0.0
        %v2439 = vmax.f32 %v2423, 0.0
        %v2440 = vmax.f32 %v2424, 0.0
        %v2441 = vmax.f32 %v2425, 0.0
        %v2442 = vmax.f32 %v2426, 0.0
        %v2443 = vmax.f32 %v2427, 0.0
        %v2444 = vmax.f32 %v2428, 0.0
        %v2445 = vmax.f32 %v2429, 0.0
        %v2446 = vmax.f32 %v2430, 0.0
        %v2447 = vmax.f32 %v2431, 0.0
        %v2448 = vmax.f32 %v2432, 0.0
        %v2449 = vmax.f32 %v2433, 0.0
        %v2450 = vmax.f32 %v2434, 0.0
        %v2451 = vmax.f32 %v2435, 0.0
        %v2452 = vlaneseq
        %v2453 = vand.u32 %v2452, 127
        %v2454 = vlaneseq
        %v2455 = vshrl.u32 %v2454, 7
        %v2456 = vmul.u32 %v2455, 16
        %vm2457 = vcmp.ge.s32.totalorder %v2453, %v2456
        %v2458 = vadd.s32 %v2456, 16
        %vm2459 = vcmp.lt.s32.totalorder %v2453, %v2458
        %vm2460 = vmand %vm2457, %vm2459
        %v2461 = vsel %vm2460, 0.0625, 0.0
        %2462 = vmatprep.subr.mxu0 0.0
        %2463 = vmatpush1.msra.mxu0 %v2451
        %2464 = vmatprep.subr.mxu0 0.0
        %2465 = vmatpush1.msra.mxu0 %v2450
        %2466 = vmatprep.subr.mxu0 0.0
        %2467 = vmatpush1.msra.mxu0 %v2449
        %2468 = vmatprep.subr.mxu0 0.0
        %2469 = vmatpush1.msra.mxu0 %v2448
        %2470 = vmatprep.subr.mxu0 0.0
        %2471 = vmatpush1.msra.mxu0 %v2447
        %2472 = vmatprep.subr.mxu0 0.0
        %2473 = vmatpush1.msra.mxu0 %v2446
        %2474 = vmatprep.subr.mxu0 0.0
        %2475 = vmatpush1.msra.mxu0 %v2445
        %2476 = vmatprep.subr.mxu0 0.0
        %2477 = vmatpush1.msra.mxu0 %v2444
        %2478 = vmatprep.subr.mxu0 0.0
        %2479 = vmatpush1.msra.mxu0 %v2443
        %2480 = vmatprep.subr.mxu0 0.0
        %2481 = vmatpush1.msra.mxu0 %v2442
        %2482 = vmatprep.subr.mxu0 0.0
        %2483 = vmatpush1.msra.mxu0 %v2441
        %2484 = vmatprep.subr.mxu0 0.0
        %2485 = vmatpush1.msra.mxu0 %v2440
        %2486 = vmatprep.subr.mxu0 0.0
        %2487 = vmatpush1.msra.mxu0 %v2439
        %2488 = vmatprep.subr.mxu0 0.0
        %2489 = vmatpush1.msra.mxu0 %v2438
        %2490 = vmatprep.subr.mxu0 0.0
        %2491 = vmatpush1.msra.mxu0 %v2437
        %2492 = vmatprep.subr.mxu0 0.0
        %2493 = vmatpush1.msra.mxu0 %v2436
        %2494 = vmatprep.subr.mxu0 0.0
        %2495 = vmatpush2.msra.mxu0 0.0
        %2496 = vmatprep.subr.mxu0 0.0
        %2497 = vmatpush2.msra.mxu0 0.0
        %2498 = vmatprep.subr.mxu0 0.0
        %2499 = vmatpush2.msra.mxu0 0.0
        %2500 = vmatprep.subr.mxu0 0.0
        %2501 = vmatpush2.msra.mxu0 0.0
        %2502 = vmatprep.subr.mxu0 0.0
        %2503 = vmatpush2.msra.mxu0 0.0
        %2504 = vmatprep.subr.mxu0 0.0
        %2505 = vmatpush2.msra.mxu0 0.0
        %2506 = vmatprep.subr.mxu0 0.0
        %2507 = vmatpush2.msra.mxu0 0.0
        %2508 = vmatprep.subr.mxu0 0.0
        %2509 = vmatpush2.msra.mxu0 0.0
        %2510 = vmatprep.subr.mxu0 0.0
        %2511 = vmatpush2.msra.mxu0 0.0
        %2512 = vmatprep.subr.mxu0 0.0
        %2513 = vmatpush2.msra.mxu0 0.0
        %2514 = vmatprep.subr.mxu0 0.0
        %2515 = vmatpush2.msra.mxu0 0.0
        %2516 = vmatprep.subr.mxu0 0.0
        %2517 = vmatpush2.msra.mxu0 0.0
        %2518 = vmatprep.subr.mxu0 0.0
        %2519 = vmatpush2.msra.mxu0 0.0
        %2520 = vmatprep.subr.mxu0 0.0
        %2521 = vmatpush2.msra.mxu0 0.0
        %2522 = vmatprep.subr.mxu0 0.0
        %2523 = vmatpush2.msra.mxu0 0.0
        %2524 = vmatprep.subr.mxu0 0.0
        %2525 = vmatpush2.msra.mxu0 0.0
        %2526 = vmatprep.mubr.f32.mxu0 0.0
        %2527 = vmatmul.mubr.f32.gmra.mxu0 %v2461
        %v2528 = vpop.f32.mrf.mxu0
        %v2529 = vadd.f32 0.0, %v2528
        %v2530 = vpop.f32.mrf.mxu0
        %2531 = vdwg.mxu0
        %v2532 = vld [vmem:[%s5] sm:$0xff]
        %v2533 = vld [vmem:[%s5 + $0x8] sm:$0xff]
        %v2534 = vld [vmem:[%s5 + $0x10] sm:$0xff]
        %v2535 = vld [vmem:[%s5 + $0x18] sm:$0xff]
        %v2536 = vld [vmem:[%s6] sm:$0x1]
        %v2538 = vlaneseq
        %v2539 = vshrl.u32 %v2538, 7
        %v2540 = vsub.s32 0, %v2539
        %v2541 = vrot.slane %v2536, %v2540
        %v2544 = vsel %vm1787, %v2529, 0
        %2546 = vmatprep.subr.mxu0 0.0
        %2547 = vmatpush1.msra.mxu0 0.0
        %2548 = vmatprep.subr.mxu0 0.0
        %2549 = vmatpush1.msra.mxu0 0.0
        %2550 = vmatprep.subr.mxu0 0.0
        %2551 = vmatpush1.msra.mxu0 0.0
        %2552 = vmatprep.subr.mxu0 0.0
        %2553 = vmatpush1.msra.mxu0 0.0
        %2554 = vmatprep.subr.mxu0 0.0
        %2555 = vmatpush1.msra.mxu0 0.0
        %2556 = vmatprep.subr.mxu0 0.0
        %2557 = vmatpush1.msra.mxu0 0.0
        %2558 = vmatprep.subr.mxu0 0.0
        %2559 = vmatpush1.msra.mxu0 0.0
        %2560 = vmatprep.subr.mxu0 0.0
        %2561 = vmatpush1.msra.mxu0 0.0
        %2562 = vmatprep.subr.mxu0 0.0
        %2563 = vmatpush1.msra.mxu0 0.0
        %2564 = vmatprep.subr.mxu0 0.0
        %2565 = vmatpush1.msra.mxu0 0.0
        %2566 = vmatprep.subr.mxu0 0.0
        %2567 = vmatpush1.msra.mxu0 0.0
        %2568 = vmatprep.subr.mxu0 0.0
        %2569 = vmatpush1.msra.mxu0 0.0
        %2570 = vmatprep.subr.mxu0 0.0
        %2571 = vmatpush1.msra.mxu0 %v2535
        %2572 = vmatprep.subr.mxu0 0.0
        %2573 = vmatpush1.msra.mxu0 %v2534
        %2574 = vmatprep.subr.mxu0 0.0
        %2575 = vmatpush1.msra.mxu0 %v2533
        %2576 = vmatprep.subr.mxu0 0.0
        %2577 = vmatpush1.msra.mxu0 %v2532
        %2578 = vmatprep.subr.mxu0 0.0
        %2579 = vmatpush2.msra.mxu0 0.0
        %2580 = vmatprep.subr.mxu0 0.0
        %2581 = vmatpush2.msra.mxu0 0.0
        %2582 = vmatprep.subr.mxu0 0.0
        %2583 = vmatpush2.msra.mxu0 0.0
        %2584 = vmatprep.subr.mxu0 0.0
        %2585 = vmatpush2.msra.mxu0 0.0
        %2586 = vmatprep.subr.mxu0 0.0
        %2587 = vmatpush2.msra.mxu0 0.0
        %2588 = vmatprep.subr.mxu0 0.0
        %2589 = vmatpush2.msra.mxu0 0.0
        %2590 = vmatprep.subr.mxu0 0.0
        %2591 = vmatpush2.msra.mxu0 0.0
        %2592 = vmatprep.subr.mxu0 0.0
        %2593 = vmatpush2.msra.mxu0 0.0
        %2594 = vmatprep.subr.mxu0 0.0
        %2595 = vmatpush2.msra.mxu0 0.0
        %2596 = vmatprep.subr.mxu0 0.0
        %2597 = vmatpush2.msra.mxu0 0.0
        %2598 = vmatprep.subr.mxu0 0.0
        %2599 = vmatpush2.msra.mxu0 0.0
        %2600 = vmatprep.subr.mxu0 0.0
        %2601 = vmatpush2.msra.mxu0 0.0
        %2602 = vmatprep.subr.mxu0 0.0
        %2603 = vmatpush2.msra.mxu0 0.0
        %2604 = vmatprep.subr.mxu0 0.0
        %2605 = vmatpush2.msra.mxu0 0.0
        %2606 = vmatprep.subr.mxu0 0.0
        %2607 = vmatpush2.msra.mxu0 0.0
        %2608 = vmatprep.subr.mxu0 0.0
        %2609 = vmatpush2.msra.mxu0 0.0
        %2610 = vmatprep.mubr.f32.mxu0 0.0
        %2611 = vmatmul.mubr.f32.gmra.mxu0 %v2544
        %v2612 = vpop.f32.mrf.mxu0
        %v2613 = vadd.f32 %v2541, %v2612
        %v2614 = vpop.f32.mrf.mxu0
        %2615 = vdwg.mxu0
        %vm2616 = vcmask 31744
        %2617 = vst.msk [vmem:[%s298] sm:$0xff] %vm2616, %v2613
        %p2618 = scmp.lt.s32.totalorder %s21, 1
        %s2619 = scalar_select %p2618, %s21, 1
        %s2620 = smul.addr %s2619, 8
        %s2621 = scalar_lea.vmem %s7, %s2620
        // Predicated region
        $region53: #{tpu_custom_call.1} parent=47 // pred_check
          %p2622 = pneg %p191
        $region54: #{tpu_custom_call.1} parent=47 // pred_check_branch
          %2624 = sbr.rel (%p2622) target = $region56
        $region55: #{tpu_custom_call.1} parent=47 // pred_region
          _
        $region56: #{tpu_custom_call.1} parent=47 // pred_fallthru
          _
      $region48: #{tpu_custom_call.1} parent=5 // pred_fallthru
        _
      %p2625 = scmp.le.s32.totalorder 2, %s16
      // Predicated region
      $region57: #{tpu_custom_call.1} parent=5 // pred_check
        %p2626 = pneg %p2625
      $region58: #{tpu_custom_call.1} parent=5 // pred_check_branch
        %2628 = sbr.rel (%p2626) target = $region60
      $region59: #{tpu_custom_call.1} parent=5 // pred_region
        %s2629 = ssub.s32 %s16, 2
        // Predicated region
        $region61: #{tpu_custom_call.1} parent=59 // pred_check
          %p2630 = pneg %p197
        $region62: #{tpu_custom_call.1} parent=59 // pred_check_branch
          %2632 = sbr.rel (%p2630) target = $region64
        $region63: #{tpu_custom_call.1} parent=59 // pred_region
          %p2633 = scmp.lt.s32.totalorder %s22, 1
          %s2634 = scalar_select %p2633, %s22, 1
          %s2635 = smul.addr %s2634, 8
          %s2636 = scalar_lea.vmem %s7, %s2635
        $region64: #{tpu_custom_call.1} parent=59 // pred_fallthru
          _
      $region60: #{tpu_custom_call.1} parent=5 // pred_fallthru
        _
    $region6: #{tpu_custom_call.1} parent=1 // loop_footer
      %s20 = sadd.s32 1, %s16
    $region7: #{tpu_custom_call.1} parent=1 // loop_footer_branch
      %15 = sbr.rel target = $region3
    $region8: #{tpu_custom_call.1} parent=1 // loop_exit
      _
    %2637 = vsyncpa [#allocation3], 1
    %s2638 = scalar_lea.sflag [#allocation3], 1
    %2639 = vsyncpa %s2638, 1

</llo_original>
